<compile_context>
chip_gen: v7x
topology: tpu7x:2x2x1
jax: 0.10.0
libtpu: 0.0.40
codegen_flags: <defaults>
</compile_context>

<pallas_src>
import functools

import jax
import jax.numpy as jnp
from jax import lax
from jax.experimental import pallas as pl
from jax.experimental.pallas import tpu as pltpu

LN_EPS = 1e-5
VMEM_LIMIT = 48 * 1024 * 1024  # fits v5e/v6e/v7x (v7x physical = 64 MiB)


# ----------------------------- tiling helpers --------------------------------
def _div_tile(dim, target, align=16):
    """Largest multiple of `align` that divides `dim` and is <= target; full dim if small."""
    if dim <= target:
        return dim
    t = (target // align) * align
    while t >= align:
        if dim % t == 0:
            return t
        t -= align
    return dim


def _edge_tile(dim, target, align=128):
    """Tile for a matmul-N / vocab axis (ragged last tile is safe): multiple of 128."""
    if dim <= target:
        return dim
    return max(align, (target // align) * align)


# ----------------------------- in-kernel helpers -----------------------------
def _layernorm_f32(x, g, b):
    x = x.astype(jnp.float32)
    mu = jnp.mean(x, axis=-1, keepdims=True)
    var = jnp.mean((x - mu) ** 2, axis=-1, keepdims=True)
    return (x - mu) * lax.rsqrt(var + LN_EPS) * g + b


def _gelu_tanh(x):
    # GPT2 / nanoGPT tanh-approximate GELU (computed in f32).
    c = 0.7978845608028654  # sqrt(2/pi)
    return 0.5 * x * (1.0 + jnp.tanh(c * (x + 0.044715 * x * x * x)))


# --------------------- fused LayerNorm + Linear (+GELU) ----------------------
def ln_linear_kernel(x_ref, g_ref, b_ref, w_ref, bias_ref, o_ref, *, gelu):
    h = _layernorm_f32(x_ref[...], g_ref[...], b_ref[...]).astype(jnp.bfloat16)
    y = jnp.dot(h, w_ref[...], preferred_element_type=jnp.float32) + bias_ref[...]
    if gelu:
        y = _gelu_tanh(y)
    o_ref[...] = y.astype(o_ref.dtype)


def ln_linear(x2d, g, b, w, bias, *, gelu=False, out_dtype=jnp.bfloat16,
              tm=256, tn=4096):
    M, K = x2d.shape
    _, N = w.shape
    TM = _div_tile(M, tm)
    TN = _edge_tile(N, tn)
    grid = (pl.cdiv(N, TN), pl.cdiv(M, TM))  # N outer => weight tile resident over M sweep
    return pl.pallas_call(
        functools.partial(ln_linear_kernel, gelu=gelu),
        out_shape=jax.ShapeDtypeStruct((M, N), out_dtype),
        grid=grid,
        in_specs=[
            pl.BlockSpec((TM, K), lambda n, m: (m, 0)),
            pl.BlockSpec((1, K), lambda n, m: (0, 0)),
            pl.BlockSpec((1, K), lambda n, m: (0, 0)),
            pl.BlockSpec((K, TN), lambda n, m: (0, n)),
            pl.BlockSpec((1, TN), lambda n, m: (0, n)),
        ],
        out_specs=pl.BlockSpec((TM, TN), lambda n, m: (m, n)),
        compiler_params=pltpu.CompilerParams(
            dimension_semantics=("parallel", "parallel"),
            vmem_limit_bytes=VMEM_LIMIT),
    )(x2d, g, b, w, bias)


# ----------------------- Linear + bias + residual add ------------------------
def linear_residual_kernel(x_ref, w_ref, bias_ref, res_ref, o_ref):
    y = jnp.dot(x_ref[...].astype(jnp.bfloat16), w_ref[...],
                preferred_element_type=jnp.float32) + bias_ref[...]
    o_ref[...] = (y + res_ref[...].astype(jnp.float32)).astype(o_ref.dtype)


def linear_residual(x2d, w, bias, res2d, *, tm=256, tn=4096):
    M, K = x2d.shape
    _, N = w.shape
    TM = _div_tile(M, tm)
    TN = _edge_tile(N, tn)
    grid = (pl.cdiv(N, TN), pl.cdiv(M, TM))
    return pl.pallas_call(
        linear_residual_kernel,
        out_shape=jax.ShapeDtypeStruct((M, N), jnp.float32),
        grid=grid,
        in_specs=[
            pl.BlockSpec((TM, K), lambda n, m: (m, 0)),
            pl.BlockSpec((K, TN), lambda n, m: (0, n)),
            pl.BlockSpec((1, TN), lambda n, m: (0, n)),
            pl.BlockSpec((TM, TN), lambda n, m: (m, n)),
        ],
        out_specs=pl.BlockSpec((TM, TN), lambda n, m: (m, n)),
        compiler_params=pltpu.CompilerParams(
            dimension_semantics=("parallel", "parallel"),
            vmem_limit_bytes=VMEM_LIMIT),
    )(x2d, w, bias, res2d)


# --------------------- flash attention (all heads batched) -------------------
def flash_attn_kernel(q_ref, k_ref, v_ref, o_ref, m_scr, l_scr, acc_scr,
                      *, tq, tk, scale):
    qi = pl.program_id(1)
    ki = pl.program_id(2)

    @pl.when(ki == 0)
    def _init():
        m_scr[...] = jnp.full(m_scr.shape, -jnp.inf, m_scr.dtype)
        l_scr[...] = jnp.zeros(l_scr.shape, l_scr.dtype)
        acc_scr[...] = jnp.zeros(acc_scr.shape, acc_scr.dtype)

    # Skip KV tiles that are entirely above the causal diagonal.
    @pl.when(ki * tk <= qi * tq + (tq - 1))
    def _compute():
        q = q_ref[0]                  # (nh, TQ, hd) bf16
        k = k_ref[0]                  # (nh, TK, hd) bf16
        v = v_ref[0]                  # (nh, TK, hd) bf16
        s = jnp.einsum("nqd,nkd->nqk", q, k,
                       preferred_element_type=jnp.float32) * scale
        row = qi * tq + lax.broadcasted_iota(jnp.int32, (tq, tk), 0)
        col = ki * tk + lax.broadcasted_iota(jnp.int32, (tq, tk), 1)
        s = jnp.where((row >= col)[None], s, -1e30)   # mask in f32 (bf16-unsafe constant)

        m_prev = m_scr[...]
        m_new = jnp.maximum(m_prev, jnp.max(s, axis=-1, keepdims=True))
        alpha = jnp.exp(m_prev - m_new)
        p = jnp.exp(s - m_new)
        l_scr[...] = alpha * l_scr[...] + jnp.sum(p, axis=-1, keepdims=True)
        acc_scr[...] = alpha * acc_scr[...] + jnp.einsum(
            "nqk,nkd->nqd", p.astype(jnp.bfloat16), v,
            preferred_element_type=jnp.float32)
        m_scr[...] = m_new

    @pl.when(ki == pl.num_programs(2) - 1)
    def _finalize():
        o_ref[0] = (acc_scr[...] *
                    pl.reciprocal(l_scr[...], approx=True)).astype(o_ref.dtype)


def flash_attention(q, k, v, *, tq=128, tk=128):
    B, nh, T, hd = q.shape
    TQ = _div_tile(T, tq)
    TK = _div_tile(T, tk)
    scale = 1.0 / (hd ** 0.5)
    grid = (B, T // TQ, T // TK)
    return pl.pallas_call(
        functools.partial(flash_attn_kernel, tq=TQ, tk=TK, scale=scale),
        out_shape=jax.ShapeDtypeStruct((B, nh, T, hd), jnp.bfloat16),
        grid=grid,
        in_specs=[
            pl.BlockSpec((1, nh, TQ, hd), lambda b, qi, ki: (b, 0, qi, 0)),
            pl.BlockSpec((1, nh, TK, hd), lambda b, qi, ki: (b, 0, ki, 0)),
            pl.BlockSpec((1, nh, TK, hd), lambda b, qi, ki: (b, 0, ki, 0)),
        ],
        out_specs=pl.BlockSpec((1, nh, TQ, hd), lambda b, qi, ki: (b, 0, qi, 0)),
        scratch_shapes=[
            pltpu.VMEM((nh, TQ, 1), jnp.float32),    # running max
            pltpu.VMEM((nh, TQ, 1), jnp.float32),    # running sum
            pltpu.VMEM((nh, TQ, hd), jnp.float32),   # output accumulator
        ],
        compiler_params=pltpu.CompilerParams(
            dimension_semantics=("parallel", "parallel", "arbitrary"),
            vmem_limit_bytes=VMEM_LIMIT),
    )(q, k, v)


# --------------------------- final ln_f + lm_head ----------------------------
def lm_head_kernel(x_ref, g_ref, b_ref, w_ref, o_ref):
    h = _layernorm_f32(x_ref[...], g_ref[...], b_ref[...]).astype(jnp.bfloat16)
    o_ref[...] = jnp.dot(h, w_ref[...],
                         preferred_element_type=jnp.float32).astype(o_ref.dtype)


def lm_head(x2d, g, b, w_lm, *, tm=256, tv=2048):
    M, C = x2d.shape
    _, V = w_lm.shape
    TM = _div_tile(M, tm)
    TV = _edge_tile(V, tv)
    grid = (pl.cdiv(V, TV), pl.cdiv(M, TM))  # vocab outer => each w_lm tile DMA'd once
    return pl.pallas_call(
        lm_head_kernel,
        out_shape=jax.ShapeDtypeStruct((M, V), jnp.float32),
        grid=grid,
        in_specs=[
            pl.BlockSpec((TM, C), lambda v, m: (m, 0)),
            pl.BlockSpec((1, C), lambda v, m: (0, 0)),
            pl.BlockSpec((1, C), lambda v, m: (0, 0)),
            pl.BlockSpec((C, TV), lambda v, m: (0, v)),
        ],
        out_specs=pl.BlockSpec((TM, TV), lambda v, m: (m, v)),
        compiler_params=pltpu.CompilerParams(
            dimension_semantics=("parallel", "parallel"),
            vmem_limit_bytes=VMEM_LIMIT),
    )(x2d, g, b, w_lm)


# ------------------------------ transformer block ----------------------------
def run_block(x, blk, n_head):
    B, T, C = x.shape
    hd = C // n_head
    x2d = x.reshape(B * T, C)

    # ln_1 + fused QKV projection  -> (B*T, 3C) bf16
    qkv = ln_linear(x2d, blk["ln1_g"], blk["ln1_b"], blk["w_qkv"], blk["b_qkv"])
    qkv = qkv.reshape(B, T, 3, n_head, hd)
    q = jnp.transpose(qkv[:, :, 0], (0, 2, 1, 3))   # (B, nh, T, hd)
    k = jnp.transpose(qkv[:, :, 1], (0, 2, 1, 3))
    v = jnp.transpose(qkv[:, :, 2], (0, 2, 1, 3))

    # causal flash attention over all heads
    attn = flash_attention(q, k, v)                              # (B, nh, T, hd) bf16
    attn = jnp.transpose(attn, (0, 2, 1, 3)).reshape(B * T, C)   # (B*T, C)

    # attention output projection + residual (f32 residual stream)
    x2d = linear_residual(attn, blk["w_aproj"], blk["b_aproj"], x2d)

    # ln_2 + MLP (fc + GELU fused, then proj + residual)
    h = ln_linear(x2d, blk["ln2_g"], blk["ln2_b"], blk["w_fc"], blk["b_fc"], gelu=True)
    x2d = linear_residual(h, blk["w_mproj"], blk["b_mproj"], x2d)
    return x2d.reshape(B, T, C)


# ------------------------------- full forward --------------------------------
def gpt2_forward(idx, params, n_head):
    B, T = idx.shape
    tok_emb = params["wte"][idx]                   # (B, T, C)  (gather: plain-JAX glue)
    pos_emb = params["wpe"][:T][None]              # (1, T, C)
    x = (tok_emb + pos_emb).astype(jnp.float32)
    for blk in params["blocks"]:
        x = run_block(x, blk, n_head)
    x2d = x.reshape(B * T, -1)
    logits = lm_head(x2d, params["lnf_g"], params["lnf_b"], params["w_lm"])
    # TODO(synk): cross-entropy loss branch (targets is not None) not implemented here.
    return logits.reshape(B, T, -1)


# ------------------------------ parameter init -------------------------------
def init_params(key, vocab_size, block_size, n_layer, n_embd):
    std = 0.02
    keys = iter(jax.random.split(key, 3 + 4 * n_layer))
    C = n_embd

    def nrm(shape, dtype=jnp.float32):
        w = std * jax.random.normal(next(keys), shape, dtype=jnp.float32)
        return w.astype(dtype)

    params = {
        "wte": nrm((vocab_size, C)),
        "wpe": nrm((block_size, C)),
        "lnf_g": jnp.ones((1, C), jnp.float32),
        "lnf_b": jnp.zeros((1, C), jnp.float32),
        # note: the torch module assigns `wte.weigth` (typo) => NO real weight tying.
        "w_lm": nrm((C, vocab_size), dtype=jnp.bfloat16),
        "blocks": [],
    }
    for _ in range(n_layer):
        params["blocks"].append({
            "ln1_g": jnp.ones((1, C), jnp.float32),
            "ln1_b": jnp.zeros((1, C), jnp.float32),
            "w_qkv": nrm((C, 3 * C), dtype=jnp.bfloat16),
            "b_qkv": jnp.zeros((1, 3 * C), jnp.float32),
            "w_aproj": nrm((C, C), dtype=jnp.bfloat16),
            "b_aproj": jnp.zeros((1, C), jnp.float32),
            "ln2_g": jnp.ones((1, C), jnp.float32),
            "ln2_b": jnp.zeros((1, C), jnp.float32),
            "w_fc": nrm((C, 4 * C), dtype=jnp.bfloat16),
            "b_fc": jnp.zeros((1, 4 * C), jnp.float32),
            "w_mproj": nrm((4 * C, C), dtype=jnp.bfloat16),
            "b_mproj": jnp.zeros((1, C), jnp.float32),
        })
    return params


if __name__ == "__main__":
    # small GPT2 config
    vocab_size, block_size, n_layer, n_head, n_embd = 64, 16, 2, 4, 32
    B, T = 2, 8

    key = jax.random.PRNGKey(0)
    pkey, ikey = jax.random.split(key)
    params = init_params(pkey, vocab_size, block_size, n_layer, n_embd)
    idx = jax.random.randint(ikey, (B, T), 0, vocab_size, dtype=jnp.int32)

    fwd = jax.jit(functools.partial(gpt2_forward, n_head=n_head))
    logits = jax.block_until_ready(fwd(idx, params))

    assert logits.shape == (B, T, vocab_size)
    assert bool(jnp.all(jnp.isfinite(logits)))
    print("KERNEL_OK")
</pallas_src>

<mosaic_0001>
module attributes {stable_mosaic.version = 11 : i64} {
  func.func @ln_linear_kernel(%arg0: i32, %arg1: i32, %arg2: memref<16x32xf32, #tpu.memory_space<vmem>>, %arg3: memref<1x32xf32, #tpu.memory_space<vmem>>, %arg4: memref<1x32xf32, #tpu.memory_space<vmem>>, %arg5: memref<32x96xbf16, #tpu.memory_space<vmem>>, %arg6: memref<1x96xf32, #tpu.memory_space<vmem>>, %arg7: memref<16x96xbf16, #tpu.memory_space<vmem>>) attributes {dimension_semantics = [#tpu.dimension_semantics<parallel>, #tpu.dimension_semantics<parallel>], iteration_bounds = array<i64: 1, 1>, scalar_prefetch = 0 : i64, scratch_operands = 0 : i64, tpu.core_type = #tpu.core_type<tc>, window_params = [{transform_indices = @transform_0, window_bounds = array<i64: 16, 32>}, {pipeline_mode = #tpu.pipeline_mode<synchronous>, transform_indices = @transform_1, window_bounds = array<i64: 1, 32>}, {pipeline_mode = #tpu.pipeline_mode<synchronous>, transform_indices = @transform_2, window_bounds = array<i64: 1, 32>}, {transform_indices = @transform_3, window_bounds = array<i64: 32, 96>}, {transform_indices = @transform_4, window_bounds = array<i64: 1, 96>}, {transform_indices = @transform_5, window_bounds = array<i64: 16, 96>}]} {
    %c0 = arith.constant 0 : index
    %c0_0 = arith.constant 0 : index
    %0 = vector.load %arg2[%c0, %c0_0] : memref<16x32xf32, #tpu.memory_space<vmem>>, vector<16x32xf32>
    %c0_1 = arith.constant 0 : index
    %c0_2 = arith.constant 0 : index
    %1 = vector.load %arg3[%c0_1, %c0_2] : memref<1x32xf32, #tpu.memory_space<vmem>>, vector<1x32xf32>
    %c0_3 = arith.constant 0 : index
    %c0_4 = arith.constant 0 : index
    %2 = vector.load %arg4[%c0_3, %c0_4] : memref<1x32xf32, #tpu.memory_space<vmem>>, vector<1x32xf32>
    %cst = arith.constant dense<0.000000e+00> : vector<16xf32>
    %3 = vector.multi_reduction <add>, %0, %cst [1] : vector<16x32xf32> to vector<16xf32>
    %4 = vector.shape_cast %3 : vector<16xf32> to vector<16x1xf32>
    %cst_5 = arith.constant 3.200000e+01 : f32
    %5 = vector.broadcast %cst_5 : f32 to vector<16x1xf32>
    %6 = arith.divf %4, %5 : vector<16x1xf32>
    %7 = vector.broadcast %6 : vector<16x1xf32> to vector<16x32xf32>
    %8 = arith.subf %0, %7 : vector<16x32xf32>
    %9 = arith.mulf %8, %8 : vector<16x32xf32>
    %cst_6 = arith.constant dense<0.000000e+00> : vector<16xf32>
    %10 = vector.multi_reduction <add>, %9, %cst_6 [1] : vector<16x32xf32> to vector<16xf32>
    %11 = vector.shape_cast %10 : vector<16xf32> to vector<16x1xf32>
    %cst_7 = arith.constant 3.200000e+01 : f32
    %12 = vector.broadcast %cst_7 : f32 to vector<16x1xf32>
    %13 = arith.divf %11, %12 : vector<16x1xf32>
    %14 = vector.broadcast %6 : vector<16x1xf32> to vector<16x32xf32>
    %15 = arith.subf %0, %14 : vector<16x32xf32>
    %cst_8 = arith.constant 9.99999974E-6 : f32
    %16 = vector.broadcast %cst_8 : f32 to vector<16x1xf32>
    %17 = arith.addf %13, %16 : vector<16x1xf32>
    %18 = math.rsqrt %17 : vector<16x1xf32>
    %19 = vector.broadcast %18 : vector<16x1xf32> to vector<16x32xf32>
    %20 = arith.mulf %15, %19 : vector<16x32xf32>
    %21 = vector.broadcast %1 : vector<1x32xf32> to vector<16x32xf32>
    %22 = arith.mulf %20, %21 : vector<16x32xf32>
    %23 = vector.broadcast %2 : vector<1x32xf32> to vector<16x32xf32>
    %24 = arith.addf %22, %23 : vector<16x32xf32>
    %25 = arith.truncf %24 : vector<16x32xf32> to vector<16x32xbf16>
    %c0_9 = arith.constant 0 : index
    %c0_10 = arith.constant 0 : index
    %26 = vector.load %arg5[%c0_9, %c0_10] : memref<32x96xbf16, #tpu.memory_space<vmem>>, vector<32x96xbf16>
    %cst_11 = arith.constant dense<0.000000e+00> : vector<16x96xf32>
    %27 = tpu.matmul %25, %26, %cst_11 {dimension_numbers = #tpu.dot_dimension_numbers<[1], [0], [0], [1], [0, 0, 1, 1], [], []>} : vector<16x32xbf16>, vector<32x96xbf16>, vector<16x96xf32> -> vector<16x96xf32>
    %c0_12 = arith.constant 0 : index
    %c0_13 = arith.constant 0 : index
    %28 = vector.load %arg6[%c0_12, %c0_13] : memref<1x96xf32, #tpu.memory_space<vmem>>, vector<1x96xf32>
    %29 = vector.broadcast %28 : vector<1x96xf32> to vector<16x96xf32>
    %30 = arith.addf %27, %29 : vector<16x96xf32>
    %31 = arith.truncf %30 : vector<16x96xf32> to vector<16x96xbf16>
    %c0_14 = arith.constant 0 : index
    %c0_15 = arith.constant 0 : index
    %32 = vector.load %arg7[%c0_14, %c0_15] : memref<16x96xbf16, #tpu.memory_space<vmem>>, vector<16x96xbf16>
    tpu.vector_store %arg7[%c0_14, %c0_15], %31 {strides = array<i32>} : memref<16x96xbf16, #tpu.memory_space<vmem>>, vector<16x96xbf16>,
    return
  }
  func.func @transform_0(%arg0: i32, %arg1: i32) -> (i32, i32) {
    %c0_i32 = arith.constant 0 : i32
    %c0_i32_0 = arith.constant 0 : i32
    return %arg1, %c0_i32 : i32, i32
  }
  func.func @transform_1(%arg0: i32, %arg1: i32) -> (i32, i32) {
    %c0_i32 = arith.constant 0 : i32
    %c0_i32_0 = arith.constant 0 : i32
    %c0_i32_1 = arith.constant 0 : i32
    return %c0_i32, %c0_i32_0 : i32, i32
  }
  func.func @transform_2(%arg0: i32, %arg1: i32) -> (i32, i32) {
    %c0_i32 = arith.constant 0 : i32
    %c0_i32_0 = arith.constant 0 : i32
    %c0_i32_1 = arith.constant 0 : i32
    return %c0_i32, %c0_i32_0 : i32, i32
  }
  func.func @transform_3(%arg0: i32, %arg1: i32) -> (i32, i32) {
    %c0_i32 = arith.constant 0 : i32
    %c0_i32_0 = arith.constant 0 : i32
    return %c0_i32, %arg0 : i32, i32
  }
  func.func @transform_4(%arg0: i32, %arg1: i32) -> (i32, i32) {
    %c0_i32 = arith.constant 0 : i32
    %c0_i32_0 = arith.constant 0 : i32
    return %c0_i32, %arg0 : i32, i32
  }
  func.func @transform_5(%arg0: i32, %arg1: i32) -> (i32, i32) {
    %c0_i32 = arith.constant 0 : i32
    return %arg1, %arg0 : i32, i32
  }
}

module attributes {stable_mosaic.version = 11 : i64} {
  func.func @flash_attn_kernel(%arg0: i32, %arg1: i32, %arg2: i32, %arg3: memref<1x4x8x8xbf16, #tpu.memory_space<vmem>>, %arg4: memref<1x4x8x8xbf16, #tpu.memory_space<vmem>>, %arg5: memref<1x4x8x8xbf16, #tpu.memory_space<vmem>>, %arg6: memref<1x4x8x8xbf16, #tpu.memory_space<vmem>>, %arg7: memref<4x8x1xf32, #tpu.memory_space<vmem>>, %arg8: memref<4x8x1xf32, #tpu.memory_space<vmem>>, %arg9: memref<4x8x8xf32, #tpu.memory_space<vmem>>) attributes {dimension_semantics = [#tpu.dimension_semantics<parallel>, #tpu.dimension_semantics<parallel>, #tpu.dimension_semantics<arbitrary>], iteration_bounds = array<i64: 2, 1, 1>, scalar_prefetch = 0 : i64, scratch_operands = 3 : i64, tpu.core_type = #tpu.core_type<tc>, window_params = [{transform_indices = @transform_0, window_bounds = array<i64: 1, 4, 8, 8>}, {transform_indices = @transform_1, window_bounds = array<i64: 1, 4, 8, 8>}, {transform_indices = @transform_2, window_bounds = array<i64: 1, 4, 8, 8>}, {transform_indices = @transform_3, window_bounds = array<i64: 1, 4, 8, 8>}]} {
    %c0_i32 = arith.constant 0 : i32
    %0 = arith.cmpi eq, %arg2, %c0_i32 : i32
    %1 = arith.extui %0 : i1 to i32
    %c0_i32_0 = arith.constant 0 : i32
    %2 = arith.cmpi ne, %1, %c0_i32_0 : i32
    scf.if %2 {
      %cst = arith.constant 0xFF800000 : f32
      %12 = vector.broadcast %cst : f32 to vector<4x8x1xf32>
      %c0 = arith.constant 0 : index
      %c0_5 = arith.constant 0 : index
      %c0_6 = arith.constant 0 : index
      %13 = vector.load %arg7[%c0, %c0_5, %c0_6] : memref<4x8x1xf32, #tpu.memory_space<vmem>>, vector<4x8x1xf32>
      tpu.vector_store %arg7[%c0, %c0_5, %c0_6], %12 {strides = array<i32>} : memref<4x8x1xf32, #tpu.memory_space<vmem>>, vector<4x8x1xf32>,
      %cst_7 = arith.constant 0.000000e+00 : f32
      %14 = vector.broadcast %cst_7 : f32 to vector<4x8x1xf32>
      %c0_8 = arith.constant 0 : index
      %c0_9 = arith.constant 0 : index
      %c0_10 = arith.constant 0 : index
      %15 = vector.load %arg8[%c0_8, %c0_9, %c0_10] : memref<4x8x1xf32, #tpu.memory_space<vmem>>, vector<4x8x1xf32>
      tpu.vector_store %arg8[%c0_8, %c0_9, %c0_10], %14 {strides = array<i32>} : memref<4x8x1xf32, #tpu.memory_space<vmem>>, vector<4x8x1xf32>,
      %cst_11 = arith.constant 0.000000e+00 : f32
      %16 = vector.broadcast %cst_11 : f32 to vector<4x8x8xf32>
      %c0_12 = arith.constant 0 : index
      %c0_13 = arith.constant 0 : index
      %c0_14 = arith.constant 0 : index
      %17 = vector.load %arg9[%c0_12, %c0_13, %c0_14] : memref<4x8x8xf32, #tpu.memory_space<vmem>>, vector<4x8x8xf32>
      tpu.vector_store %arg9[%c0_12, %c0_13, %c0_14], %16 {strides = array<i32>} : memref<4x8x8xf32, #tpu.memory_space<vmem>>, vector<4x8x8xf32>,
    } else {
    }
    %c8_i32 = arith.constant 8 : i32
    %3 = arith.muli %arg2, %c8_i32 : i32
    %c8_i32_1 = arith.constant 8 : i32
    %4 = arith.muli %arg1, %c8_i32_1 : i32
    %c7_i32 = arith.constant 7 : i32
    %5 = arith.addi %4, %c7_i32 : i32
    %6 = arith.cmpi sle, %3, %5 : i32
    %7 = arith.extui %6 : i1 to i32
    %c0_i32_2 = arith.constant 0 : i32
    %8 = arith.cmpi ne, %7, %c0_i32_2 : i32
    scf.if %8 {
      %c0 = arith.constant 0 : index
      %c0_5 = arith.constant 0 : index
      %c0_6 = arith.constant 0 : index
      %c0_7 = arith.constant 0 : index
      %12 = vector.load %arg3[%c0, %c0_5, %c0_6, %c0_7] : memref<1x4x8x8xbf16, #tpu.memory_space<vmem>>, vector<1x4x8x8xbf16>
      %13 = vector.shape_cast %12 : vector<1x4x8x8xbf16> to vector<4x8x8xbf16>
      %c0_8 = arith.constant 0 : index
      %c0_9 = arith.constant 0 : index
      %c0_10 = arith.constant 0 : index
      %c0_11 = arith.constant 0 : index
      %14 = vector.load %arg4[%c0_8, %c0_9, %c0_10, %c0_11] : memref<1x4x8x8xbf16, #tpu.memory_space<vmem>>, vector<1x4x8x8xbf16>
      %15 = vector.shape_cast %14 : vector<1x4x8x8xbf16> to vector<4x8x8xbf16>
      %c0_12 = arith.constant 0 : index
      %c0_13 = arith.constant 0 : index
      %c0_14 = arith.constant 0 : index
      %c0_15 = arith.constant 0 : index
      %16 = vector.load %arg5[%c0_12, %c0_13, %c0_14, %c0_15] : memref<1x4x8x8xbf16, #tpu.memory_space<vmem>>, vector<1x4x8x8xbf16>
      %17 = vector.shape_cast %16 : vector<1x4x8x8xbf16> to vector<4x8x8xbf16>
      "tpu.trace_start"() <{level = 10 : i32, message = "nqd,nkd->nqk"}> : () -> ()
      %cst = arith.constant dense<0.000000e+00> : vector<4x8x8xf32>
      %18 = tpu.matmul %13, %15, %cst {dimension_numbers = #tpu.dot_dimension_numbers<[2], [2], [1], [1], [0, 0, 0, 1, 1, 1], [0], [0]>} : vector<4x8x8xbf16>, vector<4x8x8xbf16>, vector<4x8x8xf32> -> vector<4x8x8xf32>
      "tpu.trace_stop"() : () -> ()
      %cst_16 = arith.constant 0.353553385 : f32
      %19 = vector.broadcast %cst_16 : f32 to vector<4x8x8xf32>
      %20 = arith.mulf %18, %19 : vector<4x8x8xf32>
      %c8_i32_17 = arith.constant 8 : i32
      %21 = arith.muli %arg1, %c8_i32_17 : i32
      %22 = tpu.iota {dimensions = array<i32: 0>} : vector<8x8xi32>
      %23 = vector.broadcast %21 : i32 to vector<8x8xi32>
      %24 = arith.addi %23, %22 : vector<8x8xi32>
      %c8_i32_18 = arith.constant 8 : i32
      %25 = arith.muli %arg2, %c8_i32_18 : i32
      %26 = tpu.iota {dimensions = array<i32: 1>} : vector<8x8xi32>
      %27 = vector.broadcast %25 : i32 to vector<8x8xi32>
      %28 = arith.addi %27, %26 : vector<8x8xi32>
      %29 = arith.cmpi sge, %24, %28 : vector<8x8xi32>
      %30 = vector.shape_cast %29 : vector<8x8xi1> to vector<1x8x8xi1>
      %cst_19 = arith.constant -1.000000e+30 : f32
      %31 = vector.shape_cast %30 : vector<1x8x8xi1> to vector<1x8x8xi1>
      %32 = vector.broadcast %31 : vector<1x8x8xi1> to vector<4x8x8xi1>
      %33 = vector.broadcast %cst_19 : f32 to vector<4x8x8xf32>
      %34 = arith.select %32, %20, %33 : vector<4x8x8xi1>, vector<4x8x8xf32>
      %c0_20 = arith.constant 0 : index
      %c0_21 = arith.constant 0 : index
      %c0_22 = arith.constant 0 : index
      %35 = vector.load %arg7[%c0_20, %c0_21, %c0_22] : memref<4x8x1xf32, #tpu.memory_space<vmem>>, vector<4x8x1xf32>
      %cst_23 = arith.constant dense<0xFF800000> : vector<4x8xf32>
      %36 = vector.multi_reduction <maximumf>, %34, %cst_23 [2] : vector<4x8x8xf32> to vector<4x8xf32>
      %37 = vector.shape_cast %36 : vector<4x8xf32> to vector<4x8x1xf32>
      %38 = arith.maximumf %35, %37 : vector<4x8x1xf32>
      %39 = arith.subf %35, %38 : vector<4x8x1xf32>
      %40 = math.exp %39 : vector<4x8x1xf32>
      %41 = vector.broadcast %38 : vector<4x8x1xf32> to vector<4x8x8xf32>
      %42 = arith.subf %34, %41 : vector<4x8x8xf32>
      %43 = math.exp %42 : vector<4x8x8xf32>
      %c0_24 = arith.constant 0 : index
      %c0_25 = arith.constant 0 : index
      %c0_26 = arith.constant 0 : index
      %44 = vector.load %arg8[%c0_24, %c0_25, %c0_26] : memref<4x8x1xf32, #tpu.memory_space<vmem>>, vector<4x8x1xf32>
      %45 = arith.mulf %40, %44 : vector<4x8x1xf32>
      %cst_27 = arith.constant dense<0.000000e+00> : vector<4x8xf32>
      %46 = vector.multi_reduction <add>, %43, %cst_27 [2] : vector<4x8x8xf32> to vector<4x8xf32>
      %47 = vector.shape_cast %46 : vector<4x8xf32> to vector<4x8x1xf32>
      %48 = arith.addf %45, %47 : vector<4x8x1xf32>
      %c0_28 = arith.constant 0 : index
      %c0_29 = arith.constant 0 : index
      %c0_30 = arith.constant 0 : index
      %49 = vector.load %arg8[%c0_28, %c0_29, %c0_30] : memref<4x8x1xf32, #tpu.memory_space<vmem>>, vector<4x8x1xf32>
      tpu.vector_store %arg8[%c0_28, %c0_29, %c0_30], %48 {strides = array<i32>} : memref<4x8x1xf32, #tpu.memory_space<vmem>>, vector<4x8x1xf32>,
      %c0_31 = arith.constant 0 : index
      %c0_32 = arith.constant 0 : index
      %c0_33 = arith.constant 0 : index
      %50 = vector.load %arg9[%c0_31, %c0_32, %c0_33] : memref<4x8x8xf32, #tpu.memory_space<vmem>>, vector<4x8x8xf32>
      %51 = vector.broadcast %40 : vector<4x8x1xf32> to vector<4x8x8xf32>
      %52 = arith.mulf %51, %50 : vector<4x8x8xf32>
      %53 = arith.truncf %43 : vector<4x8x8xf32> to vector<4x8x8xbf16>
      "tpu.trace_start"() <{level = 10 : i32, message = "nqk,nkd->nqd"}> : () -> ()
      %cst_34 = arith.constant dense<0.000000e+00> : vector<4x8x8xf32>
      %54 = tpu.matmul %53, %17, %cst_34 {dimension_numbers = #tpu.dot_dimension_numbers<[2], [1], [1], [2], [0, 0, 0, 1, 1, 2], [0], [0]>} : vector<4x8x8xbf16>, vector<4x8x8xbf16>, vector<4x8x8xf32> -> vector<4x8x8xf32>
      "tpu.trace_stop"() : () -> ()
      %55 = arith.addf %52, %54 : vector<4x8x8xf32>
      %c0_35 = arith.constant 0 : index
      %c0_36 = arith.constant 0 : index
      %c0_37 = arith.constant 0 : index
      %56 = vector.load %arg9[%c0_35, %c0_36, %c0_37] : memref<4x8x8xf32, #tpu.memory_space<vmem>>, vector<4x8x8xf32>
      tpu.vector_store %arg9[%c0_35, %c0_36, %c0_37], %55 {strides = array<i32>} : memref<4x8x8xf32, #tpu.memory_space<vmem>>, vector<4x8x8xf32>,
      %c0_38 = arith.constant 0 : index
      %c0_39 = arith.constant 0 : index
      %c0_40 = arith.constant 0 : index
      %57 = vector.load %arg7[%c0_38, %c0_39, %c0_40] : memref<4x8x1xf32, #tpu.memory_space<vmem>>, vector<4x8x1xf32>
      tpu.vector_store %arg7[%c0_38, %c0_39, %c0_40], %38 {strides = array<i32>} : memref<4x8x1xf32, #tpu.memory_space<vmem>>, vector<4x8x1xf32>,
    } else {
    }
    %c0_i32_3 = arith.constant 0 : i32
    %9 = arith.cmpi eq, %arg2, %c0_i32_3 : i32
    %10 = arith.extui %9 : i1 to i32
    %c0_i32_4 = arith.constant 0 : i32
    %11 = arith.cmpi ne, %10, %c0_i32_4 : i32
    scf.if %11 {
      %c0 = arith.constant 0 : index
      %c0_5 = arith.constant 0 : index
      %c0_6 = arith.constant 0 : index
      %12 = vector.load %arg9[%c0, %c0_5, %c0_6] : memref<4x8x8xf32, #tpu.memory_space<vmem>>, vector<4x8x8xf32>
      %c0_7 = arith.constant 0 : index
      %c0_8 = arith.constant 0 : index
      %c0_9 = arith.constant 0 : index
      %13 = vector.load %arg8[%c0_7, %c0_8, %c0_9] : memref<4x8x1xf32, #tpu.memory_space<vmem>>, vector<4x8x1xf32>
      %14 = tpu.reciprocal %13 {approx = true} : vector<4x8x1xf32> -> vector<4x8x1xf32>
      %15 = vector.broadcast %14 : vector<4x8x1xf32> to vector<4x8x8xf32>
      %16 = arith.mulf %12, %15 : vector<4x8x8xf32>
      %17 = arith.truncf %16 : vector<4x8x8xf32> to vector<4x8x8xbf16>
      %c0_10 = arith.constant 0 : index
      %c0_11 = arith.constant 0 : index
      %c0_12 = arith.constant 0 : index
      %c0_13 = arith.constant 0 : index
      %18 = vector.load %arg6[%c0_10, %c0_11, %c0_12, %c0_13] : memref<1x4x8x8xbf16, #tpu.memory_space<vmem>>, vector<1x4x8x8xbf16>
      %19 = vector.shape_cast %18 : vector<1x4x8x8xbf16> to vector<4x8x8xbf16>
      %20 = vector.shape_cast %17 : vector<4x8x8xbf16> to vector<1x4x8x8xbf16>
      tpu.vector_store %arg6[%c0_10, %c0_11, %c0_12, %c0_13], %20 {strides = array<i32>} : memref<1x4x8x8xbf16, #tpu.memory_space<vmem>>, vector<1x4x8x8xbf16>,
    } else {
    }
    return
  }
  func.func @transform_0(%arg0: i32, %arg1: i32, %arg2: i32) -> (i32, i32, i32, i32) {
    %c0_i32 = arith.constant 0 : i32
    %c0_i32_0 = arith.constant 0 : i32
    %c0_i32_1 = arith.constant 0 : i32
    return %arg0, %c0_i32, %arg1, %c0_i32_0 : i32, i32, i32, i32
  }
  func.func @transform_1(%arg0: i32, %arg1: i32, %arg2: i32) -> (i32, i32, i32, i32) {
    %c0_i32 = arith.constant 0 : i32
    %c0_i32_0 = arith.constant 0 : i32
    %c0_i32_1 = arith.constant 0 : i32
    return %arg0, %c0_i32, %arg2, %c0_i32_0 : i32, i32, i32, i32
  }
  func.func @transform_2(%arg0: i32, %arg1: i32, %arg2: i32) -> (i32, i32, i32, i32) {
    %c0_i32 = arith.constant 0 : i32
    %c0_i32_0 = arith.constant 0 : i32
    %c0_i32_1 = arith.constant 0 : i32
    return %arg0, %c0_i32, %arg2, %c0_i32_0 : i32, i32, i32, i32
  }
  func.func @transform_3(%arg0: i32, %arg1: i32, %arg2: i32) -> (i32, i32, i32, i32) {
    %c0_i32 = arith.constant 0 : i32
    %c0_i32_0 = arith.constant 0 : i32
    %c0_i32_1 = arith.constant 0 : i32
    return %arg0, %c0_i32, %arg1, %c0_i32_0 : i32, i32, i32, i32
  }
}

module attributes {stable_mosaic.version = 11 : i64} {
  func.func @linear_residual_kernel(%arg0: i32, %arg1: i32, %arg2: memref<16x32xbf16, #tpu.memory_space<vmem>>, %arg3: memref<32x32xbf16, #tpu.memory_space<vmem>>, %arg4: memref<1x32xf32, #tpu.memory_space<vmem>>, %arg5: memref<16x32xf32, #tpu.memory_space<vmem>>, %arg6: memref<16x32xf32, #tpu.memory_space<vmem>>) attributes {dimension_semantics = [#tpu.dimension_semantics<parallel>, #tpu.dimension_semantics<parallel>], iteration_bounds = array<i64: 1, 1>, scalar_prefetch = 0 : i64, scratch_operands = 0 : i64, tpu.core_type = #tpu.core_type<tc>, window_params = [{transform_indices = @transform_0, window_bounds = array<i64: 16, 32>}, {transform_indices = @transform_1, window_bounds = array<i64: 32, 32>}, {transform_indices = @transform_2, window_bounds = array<i64: 1, 32>}, {transform_indices = @transform_3, window_bounds = array<i64: 16, 32>}, {transform_indices = @transform_4, window_bounds = array<i64: 16, 32>}]} {
    %c0 = arith.constant 0 : index
    %c0_0 = arith.constant 0 : index
    %0 = vector.load %arg2[%c0, %c0_0] : memref<16x32xbf16, #tpu.memory_space<vmem>>, vector<16x32xbf16>
    %c0_1 = arith.constant 0 : index
    %c0_2 = arith.constant 0 : index
    %1 = vector.load %arg3[%c0_1, %c0_2] : memref<32x32xbf16, #tpu.memory_space<vmem>>, vector<32x32xbf16>
    %cst = arith.constant dense<0.000000e+00> : vector<16x32xf32>
    %2 = tpu.matmul %0, %1, %cst {dimension_numbers = #tpu.dot_dimension_numbers<[1], [0], [0], [1], [0, 0, 1, 1], [], []>} : vector<16x32xbf16>, vector<32x32xbf16>, vector<16x32xf32> -> vector<16x32xf32>
    %c0_3 = arith.constant 0 : index
    %c0_4 = arith.constant 0 : index
    %3 = vector.load %arg4[%c0_3, %c0_4] : memref<1x32xf32, #tpu.memory_space<vmem>>, vector<1x32xf32>
    %4 = vector.broadcast %3 : vector<1x32xf32> to vector<16x32xf32>
    %5 = arith.addf %2, %4 : vector<16x32xf32>
    %c0_5 = arith.constant 0 : index
    %c0_6 = arith.constant 0 : index
    %6 = vector.load %arg5[%c0_5, %c0_6] : memref<16x32xf32, #tpu.memory_space<vmem>>, vector<16x32xf32>
    %7 = arith.addf %5, %6 : vector<16x32xf32>
    %c0_7 = arith.constant 0 : index
    %c0_8 = arith.constant 0 : index
    %8 = vector.load %arg6[%c0_7, %c0_8] : memref<16x32xf32, #tpu.memory_space<vmem>>, vector<16x32xf32>
    tpu.vector_store %arg6[%c0_7, %c0_8], %7 {strides = array<i32>} : memref<16x32xf32, #tpu.memory_space<vmem>>, vector<16x32xf32>,
    return
  }
  func.func @transform_0(%arg0: i32, %arg1: i32) -> (i32, i32) {
    %c0_i32 = arith.constant 0 : i32
    %c0_i32_0 = arith.constant 0 : i32
    return %arg1, %c0_i32 : i32, i32
  }
  func.func @transform_1(%arg0: i32, %arg1: i32) -> (i32, i32) {
    %c0_i32 = arith.constant 0 : i32
    %c0_i32_0 = arith.constant 0 : i32
    return %c0_i32, %arg0 : i32, i32
  }
  func.func @transform_2(%arg0: i32, %arg1: i32) -> (i32, i32) {
    %c0_i32 = arith.constant 0 : i32
    %c0_i32_0 = arith.constant 0 : i32
    return %c0_i32, %arg0 : i32, i32
  }
  func.func @transform_3(%arg0: i32, %arg1: i32) -> (i32, i32) {
    %c0_i32 = arith.constant 0 : i32
    return %arg1, %arg0 : i32, i32
  }
  func.func @transform_4(%arg0: i32, %arg1: i32) -> (i32, i32) {
    %c0_i32 = arith.constant 0 : i32
    return %arg1, %arg0 : i32, i32
  }
}

module attributes {stable_mosaic.version = 11 : i64} {
  func.func @ln_linear_kernel(%arg0: i32, %arg1: i32, %arg2: memref<16x32xf32, #tpu.memory_space<vmem>>, %arg3: memref<1x32xf32, #tpu.memory_space<vmem>>, %arg4: memref<1x32xf32, #tpu.memory_space<vmem>>, %arg5: memref<32x128xbf16, #tpu.memory_space<vmem>>, %arg6: memref<1x128xf32, #tpu.memory_space<vmem>>, %arg7: memref<16x128xbf16, #tpu.memory_space<vmem>>) attributes {dimension_semantics = [#tpu.dimension_semantics<parallel>, #tpu.dimension_semantics<parallel>], iteration_bounds = array<i64: 1, 1>, scalar_prefetch = 0 : i64, scratch_operands = 0 : i64, tpu.core_type = #tpu.core_type<tc>, window_params = [{transform_indices = @transform_0, window_bounds = array<i64: 16, 32>}, {pipeline_mode = #tpu.pipeline_mode<synchronous>, transform_indices = @transform_1, window_bounds = array<i64: 1, 32>}, {pipeline_mode = #tpu.pipeline_mode<synchronous>, transform_indices = @transform_2, window_bounds = array<i64: 1, 32>}, {transform_indices = @transform_3, window_bounds = array<i64: 32, 128>}, {transform_indices = @transform_4, window_bounds = array<i64: 1, 128>}, {transform_indices = @transform_5, window_bounds = array<i64: 16, 128>}]} {
    %c0 = arith.constant 0 : index
    %c0_0 = arith.constant 0 : index
    %0 = vector.load %arg2[%c0, %c0_0] : memref<16x32xf32, #tpu.memory_space<vmem>>, vector<16x32xf32>
    %c0_1 = arith.constant 0 : index
    %c0_2 = arith.constant 0 : index
    %1 = vector.load %arg3[%c0_1, %c0_2] : memref<1x32xf32, #tpu.memory_space<vmem>>, vector<1x32xf32>
    %c0_3 = arith.constant 0 : index
    %c0_4 = arith.constant 0 : index
    %2 = vector.load %arg4[%c0_3, %c0_4] : memref<1x32xf32, #tpu.memory_space<vmem>>, vector<1x32xf32>
    %cst = arith.constant dense<0.000000e+00> : vector<16xf32>
    %3 = vector.multi_reduction <add>, %0, %cst [1] : vector<16x32xf32> to vector<16xf32>
    %4 = vector.shape_cast %3 : vector<16xf32> to vector<16x1xf32>
    %cst_5 = arith.constant 3.200000e+01 : f32
    %5 = vector.broadcast %cst_5 : f32 to vector<16x1xf32>
    %6 = arith.divf %4, %5 : vector<16x1xf32>
    %7 = vector.broadcast %6 : vector<16x1xf32> to vector<16x32xf32>
    %8 = arith.subf %0, %7 : vector<16x32xf32>
    %9 = arith.mulf %8, %8 : vector<16x32xf32>
    %cst_6 = arith.constant dense<0.000000e+00> : vector<16xf32>
    %10 = vector.multi_reduction <add>, %9, %cst_6 [1] : vector<16x32xf32> to vector<16xf32>
    %11 = vector.shape_cast %10 : vector<16xf32> to vector<16x1xf32>
    %cst_7 = arith.constant 3.200000e+01 : f32
    %12 = vector.broadcast %cst_7 : f32 to vector<16x1xf32>
    %13 = arith.divf %11, %12 : vector<16x1xf32>
    %14 = vector.broadcast %6 : vector<16x1xf32> to vector<16x32xf32>
    %15 = arith.subf %0, %14 : vector<16x32xf32>
    %cst_8 = arith.constant 9.99999974E-6 : f32
    %16 = vector.broadcast %cst_8 : f32 to vector<16x1xf32>
    %17 = arith.addf %13, %16 : vector<16x1xf32>
    %18 = math.rsqrt %17 : vector<16x1xf32>
    %19 = vector.broadcast %18 : vector<16x1xf32> to vector<16x32xf32>
    %20 = arith.mulf %15, %19 : vector<16x32xf32>
    %21 = vector.broadcast %1 : vector<1x32xf32> to vector<16x32xf32>
    %22 = arith.mulf %20, %21 : vector<16x32xf32>
    %23 = vector.broadcast %2 : vector<1x32xf32> to vector<16x32xf32>
    %24 = arith.addf %22, %23 : vector<16x32xf32>
    %25 = arith.truncf %24 : vector<16x32xf32> to vector<16x32xbf16>
    %c0_9 = arith.constant 0 : index
    %c0_10 = arith.constant 0 : index
    %26 = vector.load %arg5[%c0_9, %c0_10] : memref<32x128xbf16, #tpu.memory_space<vmem>>, vector<32x128xbf16>
    %cst_11 = arith.constant dense<0.000000e+00> : vector<16x128xf32>
    %27 = tpu.matmul %25, %26, %cst_11 {dimension_numbers = #tpu.dot_dimension_numbers<[1], [0], [0], [1], [0, 0, 1, 1], [], []>} : vector<16x32xbf16>, vector<32x128xbf16>, vector<16x128xf32> -> vector<16x128xf32>
    %c0_12 = arith.constant 0 : index
    %c0_13 = arith.constant 0 : index
    %28 = vector.load %arg6[%c0_12, %c0_13] : memref<1x128xf32, #tpu.memory_space<vmem>>, vector<1x128xf32>
    %29 = vector.broadcast %28 : vector<1x128xf32> to vector<16x128xf32>
    %30 = arith.addf %27, %29 : vector<16x128xf32>
    %cst_14 = arith.constant 5.000000e-01 : f32
    %31 = vector.broadcast %cst_14 : f32 to vector<16x128xf32>
    %32 = arith.mulf %31, %30 : vector<16x128xf32>
    %cst_15 = arith.constant 4.471500e-02 : f32
    %33 = vector.broadcast %cst_15 : f32 to vector<16x128xf32>
    %34 = arith.mulf %33, %30 : vector<16x128xf32>
    %35 = arith.mulf %34, %30 : vector<16x128xf32>
    %36 = arith.mulf %35, %30 : vector<16x128xf32>
    %37 = arith.addf %30, %36 : vector<16x128xf32>
    %cst_16 = arith.constant 0.797884583 : f32
    %38 = vector.broadcast %cst_16 : f32 to vector<16x128xf32>
    %39 = arith.mulf %38, %37 : vector<16x128xf32>
    %40 = math.tanh %39 : vector<16x128xf32>
    %cst_17 = arith.constant 1.000000e+00 : f32
    %41 = vector.broadcast %cst_17 : f32 to vector<16x128xf32>
    %42 = arith.addf %41, %40 : vector<16x128xf32>
    %43 = arith.mulf %32, %42 : vector<16x128xf32>
    %44 = arith.truncf %43 : vector<16x128xf32> to vector<16x128xbf16>
    %c0_18 = arith.constant 0 : index
    %c0_19 = arith.constant 0 : index
    %45 = vector.load %arg7[%c0_18, %c0_19] : memref<16x128xbf16, #tpu.memory_space<vmem>>, vector<16x128xbf16>
    tpu.vector_store %arg7[%c0_18, %c0_19], %44 {strides = array<i32>} : memref<16x128xbf16, #tpu.memory_space<vmem>>, vector<16x128xbf16>,
    return
  }
  func.func @transform_0(%arg0: i32, %arg1: i32) -> (i32, i32) {
    %c0_i32 = arith.constant 0 : i32
    %c0_i32_0 = arith.constant 0 : i32
    return %arg1, %c0_i32 : i32, i32
  }
  func.func @transform_1(%arg0: i32, %arg1: i32) -> (i32, i32) {
    %c0_i32 = arith.constant 0 : i32
    %c0_i32_0 = arith.constant 0 : i32
    %c0_i32_1 = arith.constant 0 : i32
    return %c0_i32, %c0_i32_0 : i32, i32
  }
  func.func @transform_2(%arg0: i32, %arg1: i32) -> (i32, i32) {
    %c0_i32 = arith.constant 0 : i32
    %c0_i32_0 = arith.constant 0 : i32
    %c0_i32_1 = arith.constant 0 : i32
    return %c0_i32, %c0_i32_0 : i32, i32
  }
  func.func @transform_3(%arg0: i32, %arg1: i32) -> (i32, i32) {
    %c0_i32 = arith.constant 0 : i32
    %c0_i32_0 = arith.constant 0 : i32
    return %c0_i32, %arg0 : i32, i32
  }
  func.func @transform_4(%arg0: i32, %arg1: i32) -> (i32, i32) {
    %c0_i32 = arith.constant 0 : i32
    %c0_i32_0 = arith.constant 0 : i32
    return %c0_i32, %arg0 : i32, i32
  }
  func.func @transform_5(%arg0: i32, %arg1: i32) -> (i32, i32) {
    %c0_i32 = arith.constant 0 : i32
    return %arg1, %arg0 : i32, i32
  }
}

module attributes {stable_mosaic.version = 11 : i64} {
  func.func @linear_residual_kernel(%arg0: i32, %arg1: i32, %arg2: memref<16x128xbf16, #tpu.memory_space<vmem>>, %arg3: memref<128x32xbf16, #tpu.memory_space<vmem>>, %arg4: memref<1x32xf32, #tpu.memory_space<vmem>>, %arg5: memref<16x32xf32, #tpu.memory_space<vmem>>, %arg6: memref<16x32xf32, #tpu.memory_space<vmem>>) attributes {dimension_semantics = [#tpu.dimension_semantics<parallel>, #tpu.dimension_semantics<parallel>], iteration_bounds = array<i64: 1, 1>, scalar_prefetch = 0 : i64, scratch_operands = 0 : i64, tpu.core_type = #tpu.core_type<tc>, window_params = [{transform_indices = @transform_0, window_bounds = array<i64: 16, 128>}, {transform_indices = @transform_1, window_bounds = array<i64: 128, 32>}, {transform_indices = @transform_2, window_bounds = array<i64: 1, 32>}, {transform_indices = @transform_3, window_bounds = array<i64: 16, 32>}, {transform_indices = @transform_4, window_bounds = array<i64: 16, 32>}]} {
    %c0 = arith.constant 0 : index
    %c0_0 = arith.constant 0 : index
    %0 = vector.load %arg2[%c0, %c0_0] : memref<16x128xbf16, #tpu.memory_space<vmem>>, vector<16x128xbf16>
    %c0_1 = arith.constant 0 : index
    %c0_2 = arith.constant 0 : index
    %1 = vector.load %arg3[%c0_1, %c0_2] : memref<128x32xbf16, #tpu.memory_space<vmem>>, vector<128x32xbf16>
    %cst = arith.constant dense<0.000000e+00> : vector<16x32xf32>
    %2 = tpu.matmul %0, %1, %cst {dimension_numbers = #tpu.dot_dimension_numbers<[1], [0], [0], [1], [0, 0, 1, 1], [], []>} : vector<16x128xbf16>, vector<128x32xbf16>, vector<16x32xf32> -> vector<16x32xf32>
    %c0_3 = arith.constant 0 : index
    %c0_4 = arith.constant 0 : index
    %3 = vector.load %arg4[%c0_3, %c0_4] : memref<1x32xf32, #tpu.memory_space<vmem>>, vector<1x32xf32>
    %4 = vector.broadcast %3 : vector<1x32xf32> to vector<16x32xf32>
    %5 = arith.addf %2, %4 : vector<16x32xf32>
    %c0_5 = arith.constant 0 : index
    %c0_6 = arith.constant 0 : index
    %6 = vector.load %arg5[%c0_5, %c0_6] : memref<16x32xf32, #tpu.memory_space<vmem>>, vector<16x32xf32>
    %7 = arith.addf %5, %6 : vector<16x32xf32>
    %c0_7 = arith.constant 0 : index
    %c0_8 = arith.constant 0 : index
    %8 = vector.load %arg6[%c0_7, %c0_8] : memref<16x32xf32, #tpu.memory_space<vmem>>, vector<16x32xf32>
    tpu.vector_store %arg6[%c0_7, %c0_8], %7 {strides = array<i32>} : memref<16x32xf32, #tpu.memory_space<vmem>>, vector<16x32xf32>,
    return
  }
  func.func @transform_0(%arg0: i32, %arg1: i32) -> (i32, i32) {
    %c0_i32 = arith.constant 0 : i32
    %c0_i32_0 = arith.constant 0 : i32
    return %arg1, %c0_i32 : i32, i32
  }
  func.func @transform_1(%arg0: i32, %arg1: i32) -> (i32, i32) {
    %c0_i32 = arith.constant 0 : i32
    %c0_i32_0 = arith.constant 0 : i32
    return %c0_i32, %arg0 : i32, i32
  }
  func.func @transform_2(%arg0: i32, %arg1: i32) -> (i32, i32) {
    %c0_i32 = arith.constant 0 : i32
    %c0_i32_0 = arith.constant 0 : i32
    return %c0_i32, %arg0 : i32, i32
  }
  func.func @transform_3(%arg0: i32, %arg1: i32) -> (i32, i32) {
    %c0_i32 = arith.constant 0 : i32
    return %arg1, %arg0 : i32, i32
  }
  func.func @transform_4(%arg0: i32, %arg1: i32) -> (i32, i32) {
    %c0_i32 = arith.constant 0 : i32
    return %arg1, %arg0 : i32, i32
  }
}

module attributes {stable_mosaic.version = 11 : i64} {
  func.func @lm_head_kernel(%arg0: i32, %arg1: i32, %arg2: memref<16x32xf32, #tpu.memory_space<vmem>>, %arg3: memref<1x32xf32, #tpu.memory_space<vmem>>, %arg4: memref<1x32xf32, #tpu.memory_space<vmem>>, %arg5: memref<32x64xbf16, #tpu.memory_space<vmem>>, %arg6: memref<16x64xf32, #tpu.memory_space<vmem>>) attributes {dimension_semantics = [#tpu.dimension_semantics<parallel>, #tpu.dimension_semantics<parallel>], iteration_bounds = array<i64: 1, 1>, scalar_prefetch = 0 : i64, scratch_operands = 0 : i64, tpu.core_type = #tpu.core_type<tc>, window_params = [{transform_indices = @transform_0, window_bounds = array<i64: 16, 32>}, {pipeline_mode = #tpu.pipeline_mode<synchronous>, transform_indices = @transform_1, window_bounds = array<i64: 1, 32>}, {pipeline_mode = #tpu.pipeline_mode<synchronous>, transform_indices = @transform_2, window_bounds = array<i64: 1, 32>}, {transform_indices = @transform_3, window_bounds = array<i64: 32, 64>}, {transform_indices = @transform_4, window_bounds = array<i64: 16, 64>}]} {
    %c0 = arith.constant 0 : index
    %c0_0 = arith.constant 0 : index
    %0 = vector.load %arg2[%c0, %c0_0] : memref<16x32xf32, #tpu.memory_space<vmem>>, vector<16x32xf32>
    %c0_1 = arith.constant 0 : index
    %c0_2 = arith.constant 0 : index
    %1 = vector.load %arg3[%c0_1, %c0_2] : memref<1x32xf32, #tpu.memory_space<vmem>>, vector<1x32xf32>
    %c0_3 = arith.constant 0 : index
    %c0_4 = arith.constant 0 : index
    %2 = vector.load %arg4[%c0_3, %c0_4] : memref<1x32xf32, #tpu.memory_space<vmem>>, vector<1x32xf32>
    %cst = arith.constant dense<0.000000e+00> : vector<16xf32>
    %3 = vector.multi_reduction <add>, %0, %cst [1] : vector<16x32xf32> to vector<16xf32>
    %4 = vector.shape_cast %3 : vector<16xf32> to vector<16x1xf32>
    %cst_5 = arith.constant 3.200000e+01 : f32
    %5 = vector.broadcast %cst_5 : f32 to vector<16x1xf32>
    %6 = arith.divf %4, %5 : vector<16x1xf32>
    %7 = vector.broadcast %6 : vector<16x1xf32> to vector<16x32xf32>
    %8 = arith.subf %0, %7 : vector<16x32xf32>
    %9 = arith.mulf %8, %8 : vector<16x32xf32>
    %cst_6 = arith.constant dense<0.000000e+00> : vector<16xf32>
    %10 = vector.multi_reduction <add>, %9, %cst_6 [1] : vector<16x32xf32> to vector<16xf32>
    %11 = vector.shape_cast %10 : vector<16xf32> to vector<16x1xf32>
    %cst_7 = arith.constant 3.200000e+01 : f32
    %12 = vector.broadcast %cst_7 : f32 to vector<16x1xf32>
    %13 = arith.divf %11, %12 : vector<16x1xf32>
    %14 = vector.broadcast %6 : vector<16x1xf32> to vector<16x32xf32>
    %15 = arith.subf %0, %14 : vector<16x32xf32>
    %cst_8 = arith.constant 9.99999974E-6 : f32
    %16 = vector.broadcast %cst_8 : f32 to vector<16x1xf32>
    %17 = arith.addf %13, %16 : vector<16x1xf32>
    %18 = math.rsqrt %17 : vector<16x1xf32>
    %19 = vector.broadcast %18 : vector<16x1xf32> to vector<16x32xf32>
    %20 = arith.mulf %15, %19 : vector<16x32xf32>
    %21 = vector.broadcast %1 : vector<1x32xf32> to vector<16x32xf32>
    %22 = arith.mulf %20, %21 : vector<16x32xf32>
    %23 = vector.broadcast %2 : vector<1x32xf32> to vector<16x32xf32>
    %24 = arith.addf %22, %23 : vector<16x32xf32>
    %25 = arith.truncf %24 : vector<16x32xf32> to vector<16x32xbf16>
    %c0_9 = arith.constant 0 : index
    %c0_10 = arith.constant 0 : index
    %26 = vector.load %arg5[%c0_9, %c0_10] : memref<32x64xbf16, #tpu.memory_space<vmem>>, vector<32x64xbf16>
    %cst_11 = arith.constant dense<0.000000e+00> : vector<16x64xf32>
    %27 = tpu.matmul %25, %26, %cst_11 {dimension_numbers = #tpu.dot_dimension_numbers<[1], [0], [0], [1], [0, 0, 1, 1], [], []>} : vector<16x32xbf16>, vector<32x64xbf16>, vector<16x64xf32> -> vector<16x64xf32>
    %c0_12 = arith.constant 0 : index
    %c0_13 = arith.constant 0 : index
    %28 = vector.load %arg6[%c0_12, %c0_13] : memref<16x64xf32, #tpu.memory_space<vmem>>, vector<16x64xf32>
    tpu.vector_store %arg6[%c0_12, %c0_13], %27 {strides = array<i32>} : memref<16x64xf32, #tpu.memory_space<vmem>>, vector<16x64xf32>,
    return
  }
  func.func @transform_0(%arg0: i32, %arg1: i32) -> (i32, i32) {
    %c0_i32 = arith.constant 0 : i32
    %c0_i32_0 = arith.constant 0 : i32
    return %arg1, %c0_i32 : i32, i32
  }
  func.func @transform_1(%arg0: i32, %arg1: i32) -> (i32, i32) {
    %c0_i32 = arith.constant 0 : i32
    %c0_i32_0 = arith.constant 0 : i32
    %c0_i32_1 = arith.constant 0 : i32
    return %c0_i32, %c0_i32_0 : i32, i32
  }
  func.func @transform_2(%arg0: i32, %arg1: i32) -> (i32, i32) {
    %c0_i32 = arith.constant 0 : i32
    %c0_i32_0 = arith.constant 0 : i32
    %c0_i32_1 = arith.constant 0 : i32
    return %c0_i32, %c0_i32_0 : i32, i32
  }
  func.func @transform_3(%arg0: i32, %arg1: i32) -> (i32, i32) {
    %c0_i32 = arith.constant 0 : i32
    %c0_i32_0 = arith.constant 0 : i32
    return %c0_i32, %arg0 : i32, i32
  }
  func.func @transform_4(%arg0: i32, %arg1: i32) -> (i32, i32) {
    %c0_i32 = arith.constant 0 : i32
    return %arg1, %arg0 : i32, i32
  }
}

</mosaic_0001>

<llo_original>
// kernel: gpt2_forward.11
$region0: #{gpt2_forward.11}
  #allocation0 [shape = 'u32[]', space=smem, size = 0x4, offset = 0x4, fixed_abs, tag = 'smem constant byte address 0x4 - core index']
  #allocation1 [shape = 'u32[144,128]{1,0:T(1,128)}', space=vmem, size = 0x12000, scoped, tag = 'internal scratch']
  %s0 = inlined_call_operand.vmem [shape: f32[16,32], index: 0, kind: input, shape index: {}]
  %s1 = inlined_call_operand.vmem [shape: f32[1,32], index: 1, kind: input, shape index: {}]
  %s2 = inlined_call_operand.vmem [shape: f32[1,32], index: 2, kind: input, shape index: {}]
  %s3 = inlined_call_operand.vmem [shape: bf16[32,96], index: 3, kind: input, shape index: {}]
  %s4 = inlined_call_operand.vmem [shape: f32[1,96], index: 4, kind: input, shape index: {}]
  %s5 = inlined_call_operand.vmem [shape: bf16[16,96], index: 5, kind: output, shape index: {}]
  %s6 = sld [smem:[#allocation0]]
  $region30: #{gpt2_forward.11} parent=0
    _
  %s8 = ssub.s32 1, %s6
  %s9 = scalar_select 0, %s8, %s6
  // Predicated region
  $region2: #{gpt2_forward.11} parent=0 // pred_check
    _
  $region3: #{gpt2_forward.11} parent=0 // pred_check_branch
    %11 = sbr.rel (0) target = $region5
  $region4: #{gpt2_forward.11} parent=0 // pred_region
    _
  $region5: #{gpt2_forward.11} parent=0 // pred_fallthru
    _
  // Predicated region
  $region6: #{gpt2_forward.11} parent=0 // pred_check
    _
  $region7: #{gpt2_forward.11} parent=0 // pred_check_branch
    %13 = sbr.rel (0) target = $region9
  $region8: #{gpt2_forward.11} parent=0 // pred_region
    _
  $region9: #{gpt2_forward.11} parent=0 // pred_fallthru
    _
  // Predicated region
  $region10: #{gpt2_forward.11} parent=0 // pred_check
    _
  $region11: #{gpt2_forward.11} parent=0 // pred_check_branch
    %15 = sbr.rel (0) target = $region13
  $region12: #{gpt2_forward.11} parent=0 // pred_region
    _
  $region13: #{gpt2_forward.11} parent=0 // pred_fallthru
    _
  // Predicated region
  $region14: #{gpt2_forward.11} parent=0 // pred_check
    _
  $region15: #{gpt2_forward.11} parent=0 // pred_check_branch
    %17 = sbr.rel (0) target = $region17
  $region16: #{gpt2_forward.11} parent=0 // pred_region
    _
  $region17: #{gpt2_forward.11} parent=0 // pred_fallthru
    _
  // Predicated region
  $region18: #{gpt2_forward.11} parent=0 // pred_check
    _
  $region19: #{gpt2_forward.11} parent=0 // pred_check_branch
    %19 = sbr.rel (0) target = $region21
  $region20: #{gpt2_forward.11} parent=0 // pred_region
    _
  $region21: #{gpt2_forward.11} parent=0 // pred_fallthru
    _
  %v21 = vld [vmem:[%s0] sm:$0xff]
  %v22 = vld [vmem:[%s0 + $0x8] sm:$0xff]
  %v23 = vld [vmem:[%s1] sm:$0x1]
  %v24 = vld [vmem:[%s2] sm:$0x1]
  %vm25 = vcmask 261120
  %v26 = vsel %vm25, %v21, 0.0
  %27 = vadd.xlane.f32.xlu0 %v26
  %v28 = vpop.xlane.xlu0 %27
  %v29 = vsel %vm25, %v22, 0.0
  %30 = vadd.xlane.f32.xlu0 %v29
  %v31 = vpop.xlane.xlu0 %30
  %v32 = vrcp.pop 32.0
  %v33 = vmul.f32 %v28, %v32
  %v34 = vmul.f32 %v31, %v32
  %v35 = vsub.f32 %v21, %v33
  %v36 = vsub.f32 %v22, %v34
  %v37 = vmul.f32 %v35, %v35
  %v38 = vmul.f32 %v36, %v36
  %v39 = vsel %vm25, %v37, 0.0
  %40 = vadd.xlane.f32.xlu0 %v39
  %v41 = vpop.xlane.xlu0 %40
  %v42 = vsel %vm25, %v38, 0.0
  %43 = vadd.xlane.f32.xlu0 %v42
  %v44 = vpop.xlane.xlu0 %43
  %v45 = vmul.f32 %v41, %v32
  %v46 = vmul.f32 %v44, %v32
  %v47 = vadd.f32 %v45, 1e-05
  %v48 = vadd.f32 %v46, 1e-05
  %v49 = vrsqrt.pop %v47
  %v50 = vrsqrt.pop %v48
  %v51 = vmul.f32 %v35, %v49
  %v52 = vmul.f32 %v36, %v50
  %v54 = vlaneseq
  %v55 = vshrl.u32 %v54, 7
  %v56 = vsub.s32 0, %v55
  %v57 = vrot.slane %v23, %v56
  %v59 = vmul.f32 %v51, %v57
  %v60 = vmul.f32 %v52, %v57
  %v62 = vlaneseq
  %v63 = vshrl.u32 %v62, 7
  %v64 = vsub.s32 0, %v63
  %v65 = vrot.slane %v24, %v64
  %v67 = vadd.f32 %v59, %v65
  %v68 = vadd.f32 %v60, %v65
  %v69 = vpack.c.bf16 %v68, %v67
  %v70 = vld [vmem:[%s3] sm:$0xf]
  %v71 = vld [vmem:[%s3 + $0x4] sm:$0xf]
  %v72 = vld [vmem:[%s3 + $0x8] sm:$0xf]
  %v73 = vld [vmem:[%s3 + $0xc] sm:$0xf]
  %v74 = vld [vmem:[%s4] sm:$0x1]
  %v76 = vlaneseq
  %v77 = vshrl.u32 %v76, 7
  %v78 = vsub.s32 0, %v77
  %v79 = vrot.slane %v74, %v78
  %v85 = vunpack.c.l.b16 %v70
  %v86 = vunpack.c.l.b16 %v71
  %v87 = vunpack.c.l.b16 %v72
  %v88 = vunpack.c.l.b16 %v73
  %v89 = vpack.c.b16 %v86, %v85
  %v90 = vpack.c.b16 %v88, %v87
  %v94 = vsel %vm25, %v69, 0
  %96 = vmatprep.subr.bf16.mxu0 0
  %97 = vmatpush1.bf16.msra.mxu0 %v89
  %98 = vmatprep.subr.bf16.mxu0 0
  %99 = vmatpush1.bf16.msra.mxu0 %v90
  %100 = vmatprep.subr.bf16.mxu0 0
  %101 = vmatpush1.bf16.msra.mxu0 0
  %102 = vmatprep.subr.bf16.mxu0 0
  %103 = vmatpush1.bf16.msra.mxu0 0
  %104 = vmatprep.subr.bf16.mxu0 0
  %105 = vmatpush1.bf16.msra.mxu0 0
  %106 = vmatprep.subr.bf16.mxu0 0
  %107 = vmatpush1.bf16.msra.mxu0 0
  %108 = vmatprep.subr.bf16.mxu0 0
  %109 = vmatpush1.bf16.msra.mxu0 0
  %110 = vmatprep.subr.bf16.mxu0 0
  %111 = vmatpush1.bf16.msra.mxu0 0
  %112 = vmatprep.subr.bf16.mxu0 0
  %113 = vmatpush1.bf16.msra.mxu0 0
  %114 = vmatprep.subr.bf16.mxu0 0
  %115 = vmatpush1.bf16.msra.mxu0 0
  %116 = vmatprep.subr.bf16.mxu0 0
  %117 = vmatpush1.bf16.msra.mxu0 0
  %118 = vmatprep.subr.bf16.mxu0 0
  %119 = vmatpush1.bf16.msra.mxu0 0
  %120 = vmatprep.subr.bf16.mxu0 0
  %121 = vmatpush1.bf16.msra.mxu0 0
  %122 = vmatprep.subr.bf16.mxu0 0
  %123 = vmatpush1.bf16.msra.mxu0 0
  %124 = vmatprep.subr.bf16.mxu0 0
  %125 = vmatpush1.bf16.msra.mxu0 0
  %126 = vmatprep.subr.bf16.mxu0 0
  %127 = vmatpush1.bf16.msra.mxu0 0
  %128 = vmatprep.mubr.bf16.mxu0 0
  %129 = vmatmul.mubr.bf16.gmra.mrb[0].mxu0 %v94
  %v130 = vpop.f32.mrb[0].mxu0
  %v131 = vadd.f32 %v79, %v130
  %v132 = vpop.f32.mrb[0].mxu0
  %v133 = vpop.f32.mrb[0].mxu0
  %v134 = vadd.f32 %v79, %v133
  %v135 = vpop.f32.mrb[0].mxu0
  %136 = vdwg.mxu0
  %v137 = vpack.c.bf16 %v134, %v131
  %v139 = vunpack.c.l.b16 %v137
  %v140 = vunpack.c.h.b16 %v137
  %v141 = vpack.c.b16 %v139, %v139
  %v142 = vpack.c.b16 %v140, %v140
  %vm145 = vcmask 781312
  %146 = vst.msk [vmem:[%s5] sm:$0xf] %vm145, %v141
  %147 = vst.msk [vmem:[%s5 + $0x4] sm:$0xf] %vm145, %v142
  // Predicated region
  $region22: #{gpt2_forward.11} parent=0 // pred_check
    _
  $region23: #{gpt2_forward.11} parent=0 // pred_check_branch
    %149 = sbr.rel (0) target = $region25
  $region24: #{gpt2_forward.11} parent=0 // pred_region
    _
  $region25: #{gpt2_forward.11} parent=0 // pred_fallthru
    _
  // Predicated region
  $region26: #{gpt2_forward.11} parent=0 // pred_check
    _
  $region27: #{gpt2_forward.11} parent=0 // pred_check_branch
    %151 = sbr.rel (0) target = $region29
  $region28: #{gpt2_forward.11} parent=0 // pred_region
    _
  $region29: #{gpt2_forward.11} parent=0 // pred_fallthru
    _

// kernel: gpt2_forward.13
$region0: #{gpt2_forward.13}
  #allocation0 [shape = 'u32[]', space=smem, size = 0x4, offset = 0x4, fixed_abs, tag = 'smem constant byte address 0x4 - core index']
  #allocation1 [shape = 'u32[144,128]{1,0:T(1,128)}', space=vmem, size = 0x12000, scoped, tag = 'internal scratch']
  %s0 = inlined_call_operand.vmem [shape: bf16[16,32], index: 0, kind: input, shape index: {}]
  %s1 = inlined_call_operand.vmem [shape: bf16[32,32], index: 1, kind: input, shape index: {}]
  %s2 = inlined_call_operand.vmem [shape: f32[1,32], index: 2, kind: input, shape index: {}]
  %s3 = inlined_call_operand.vmem [shape: f32[16,32], index: 3, kind: input, shape index: {}]
  %s4 = inlined_call_operand.vmem [shape: f32[16,32], index: 4, kind: output, shape index: {}]
  %s5 = sld [smem:[#allocation0]]
  $region26: #{gpt2_forward.13} parent=0
    _
  %s7 = ssub.s32 1, %s5
  %s8 = scalar_select 0, %s7, %s5
  // Predicated region
  $region2: #{gpt2_forward.13} parent=0 // pred_check
    _
  $region3: #{gpt2_forward.13} parent=0 // pred_check_branch
    %10 = sbr.rel (0) target = $region5
  $region4: #{gpt2_forward.13} parent=0 // pred_region
    _
  $region5: #{gpt2_forward.13} parent=0 // pred_fallthru
    _
  // Predicated region
  $region6: #{gpt2_forward.13} parent=0 // pred_check
    _
  $region7: #{gpt2_forward.13} parent=0 // pred_check_branch
    %12 = sbr.rel (0) target = $region9
  $region8: #{gpt2_forward.13} parent=0 // pred_region
    _
  $region9: #{gpt2_forward.13} parent=0 // pred_fallthru
    _
  // Predicated region
  $region10: #{gpt2_forward.13} parent=0 // pred_check
    _
  $region11: #{gpt2_forward.13} parent=0 // pred_check_branch
    %14 = sbr.rel (0) target = $region13
  $region12: #{gpt2_forward.13} parent=0 // pred_region
    _
  $region13: #{gpt2_forward.13} parent=0 // pred_fallthru
    _
  // Predicated region
  $region14: #{gpt2_forward.13} parent=0 // pred_check
    _
  $region15: #{gpt2_forward.13} parent=0 // pred_check_branch
    %16 = sbr.rel (0) target = $region17
  $region16: #{gpt2_forward.13} parent=0 // pred_region
    _
  $region17: #{gpt2_forward.13} parent=0 // pred_fallthru
    _
  %v18 = vld [vmem:[%s0] sm:$0xf]
  %v19 = vld [vmem:[%s0 + $0x4] sm:$0xf]
  %v20 = vld [vmem:[%s1] sm:$0xf]
  %v21 = vld [vmem:[%s1 + $0x4] sm:$0xf]
  %v22 = vld [vmem:[%s1 + $0x8] sm:$0xf]
  %v23 = vld [vmem:[%s1 + $0xc] sm:$0xf]
  %v24 = vld [vmem:[%s2] sm:$0x1]
  %v26 = vlaneseq
  %v27 = vshrl.u32 %v26, 7
  %v28 = vsub.s32 0, %v27
  %v29 = vrot.slane %v24, %v28
  %v33 = vunpack.c.l.b16 %v18
  %v34 = vunpack.c.l.b16 %v19
  %v35 = vpack.c.b16 %v34, %v33
  %v40 = vunpack.c.l.b16 %v20
  %v41 = vunpack.c.l.b16 %v21
  %v42 = vunpack.c.l.b16 %v22
  %v43 = vunpack.c.l.b16 %v23
  %v44 = vpack.c.b16 %v41, %v40
  %v45 = vpack.c.b16 %v43, %v42
  %vm48 = vcmask 261120
  %v50 = vsel %vm48, %v35, 0
  %52 = vmatprep.subr.bf16.mxu0 0
  %53 = vmatpush1.bf16.msra.mxu0 %v44
  %54 = vmatprep.subr.bf16.mxu0 0
  %55 = vmatpush1.bf16.msra.mxu0 %v45
  %56 = vmatprep.subr.bf16.mxu0 0
  %57 = vmatpush1.bf16.msra.mxu0 0
  %58 = vmatprep.subr.bf16.mxu0 0
  %59 = vmatpush1.bf16.msra.mxu0 0
  %60 = vmatprep.subr.bf16.mxu0 0
  %61 = vmatpush1.bf16.msra.mxu0 0
  %62 = vmatprep.subr.bf16.mxu0 0
  %63 = vmatpush1.bf16.msra.mxu0 0
  %64 = vmatprep.subr.bf16.mxu0 0
  %65 = vmatpush1.bf16.msra.mxu0 0
  %66 = vmatprep.subr.bf16.mxu0 0
  %67 = vmatpush1.bf16.msra.mxu0 0
  %68 = vmatprep.subr.bf16.mxu0 0
  %69 = vmatpush1.bf16.msra.mxu0 0
  %70 = vmatprep.subr.bf16.mxu0 0
  %71 = vmatpush1.bf16.msra.mxu0 0
  %72 = vmatprep.subr.bf16.mxu0 0
  %73 = vmatpush1.bf16.msra.mxu0 0
  %74 = vmatprep.subr.bf16.mxu0 0
  %75 = vmatpush1.bf16.msra.mxu0 0
  %76 = vmatprep.subr.bf16.mxu0 0
  %77 = vmatpush1.bf16.msra.mxu0 0
  %78 = vmatprep.subr.bf16.mxu0 0
  %79 = vmatpush1.bf16.msra.mxu0 0
  %80 = vmatprep.subr.bf16.mxu0 0
  %81 = vmatpush1.bf16.msra.mxu0 0
  %82 = vmatprep.subr.bf16.mxu0 0
  %83 = vmatpush1.bf16.msra.mxu0 0
  %84 = vmatprep.mubr.bf16.mxu0 0
  %85 = vmatmul.mubr.bf16.gmra.mrb[0].mxu0 %v50
  %v86 = vpop.f32.mrb[0].mxu0
  %v87 = vadd.f32 %v29, %v86
  %v88 = vpop.f32.mrb[0].mxu0
  %v89 = vpop.f32.mrb[0].mxu0
  %v90 = vadd.f32 %v29, %v89
  %v91 = vpop.f32.mrb[0].mxu0
  %92 = vdwg.mxu0
  %v93 = vld [vmem:[%s3] sm:$0xff]
  %v94 = vld [vmem:[%s3 + $0x8] sm:$0xff]
  %v95 = vadd.f32 %v87, %v93
  %v96 = vadd.f32 %v90, %v94
  %97 = vst.msk [vmem:[%s4] sm:$0xff] %vm48, %v95
  %98 = vst.msk [vmem:[%s4 + $0x8] sm:$0xff] %vm48, %v96
  // Predicated region
  $region18: #{gpt2_forward.13} parent=0 // pred_check
    _
  $region19: #{gpt2_forward.13} parent=0 // pred_check_branch
    %100 = sbr.rel (0) target = $region21
  $region20: #{gpt2_forward.13} parent=0 // pred_region
    _
  $region21: #{gpt2_forward.13} parent=0 // pred_fallthru
    _
  // Predicated region
  $region22: #{gpt2_forward.13} parent=0 // pred_check
    _
  $region23: #{gpt2_forward.13} parent=0 // pred_check_branch
    %102 = sbr.rel (0) target = $region25
  $region24: #{gpt2_forward.13} parent=0 // pred_region
    _
  $region25: #{gpt2_forward.13} parent=0 // pred_fallthru
    _

// kernel: gpt2_forward.14
$region0: #{gpt2_forward.14}
  #allocation0 [shape = 'u32[]', space=smem, size = 0x4, offset = 0x4, fixed_abs, tag = 'smem constant byte address 0x4 - core index']
  #allocation1 [shape = 'u32[144,128]{1,0:T(1,128)}', space=vmem, size = 0x12000, scoped, tag = 'internal scratch']
  %s0 = inlined_call_operand.vmem [shape: f32[16,32], index: 0, kind: input, shape index: {}]
  %s1 = inlined_call_operand.vmem [shape: f32[1,32], index: 1, kind: input, shape index: {}]
  %s2 = inlined_call_operand.vmem [shape: f32[1,32], index: 2, kind: input, shape index: {}]
  %s3 = inlined_call_operand.vmem [shape: bf16[32,128], index: 3, kind: input, shape index: {}]
  %s4 = inlined_call_operand.vmem [shape: f32[1,128], index: 4, kind: input, shape index: {}]
  %s5 = inlined_call_operand.vmem [shape: bf16[16,128], index: 5, kind: output, shape index: {}]
  %s6 = sld [smem:[#allocation0]]
  $region30: #{gpt2_forward.14} parent=0
    _
  %s8 = ssub.s32 1, %s6
  %s9 = scalar_select 0, %s8, %s6
  // Predicated region
  $region2: #{gpt2_forward.14} parent=0 // pred_check
    _
  $region3: #{gpt2_forward.14} parent=0 // pred_check_branch
    %11 = sbr.rel (0) target = $region5
  $region4: #{gpt2_forward.14} parent=0 // pred_region
    _
  $region5: #{gpt2_forward.14} parent=0 // pred_fallthru
    _
  // Predicated region
  $region6: #{gpt2_forward.14} parent=0 // pred_check
    _
  $region7: #{gpt2_forward.14} parent=0 // pred_check_branch
    %13 = sbr.rel (0) target = $region9
  $region8: #{gpt2_forward.14} parent=0 // pred_region
    _
  $region9: #{gpt2_forward.14} parent=0 // pred_fallthru
    _
  // Predicated region
  $region10: #{gpt2_forward.14} parent=0 // pred_check
    _
  $region11: #{gpt2_forward.14} parent=0 // pred_check_branch
    %15 = sbr.rel (0) target = $region13
  $region12: #{gpt2_forward.14} parent=0 // pred_region
    _
  $region13: #{gpt2_forward.14} parent=0 // pred_fallthru
    _
  // Predicated region
  $region14: #{gpt2_forward.14} parent=0 // pred_check
    _
  $region15: #{gpt2_forward.14} parent=0 // pred_check_branch
    %17 = sbr.rel (0) target = $region17
  $region16: #{gpt2_forward.14} parent=0 // pred_region
    _
  $region17: #{gpt2_forward.14} parent=0 // pred_fallthru
    _
  // Predicated region
  $region18: #{gpt2_forward.14} parent=0 // pred_check
    _
  $region19: #{gpt2_forward.14} parent=0 // pred_check_branch
    %19 = sbr.rel (0) target = $region21
  $region20: #{gpt2_forward.14} parent=0 // pred_region
    _
  $region21: #{gpt2_forward.14} parent=0 // pred_fallthru
    _
  %v21 = vld [vmem:[%s0] sm:$0xff]
  %v22 = vld [vmem:[%s0 + $0x8] sm:$0xff]
  %v23 = vld [vmem:[%s1] sm:$0x1]
  %v24 = vld [vmem:[%s2] sm:$0x1]
  %vm25 = vcmask 261120
  %v26 = vsel %vm25, %v21, 0.0
  %27 = vadd.xlane.f32.xlu0 %v26
  %v28 = vpop.xlane.xlu0 %27
  %v29 = vsel %vm25, %v22, 0.0
  %30 = vadd.xlane.f32.xlu0 %v29
  %v31 = vpop.xlane.xlu0 %30
  %v32 = vrcp.pop 32.0
  %v33 = vmul.f32 %v28, %v32
  %v34 = vmul.f32 %v31, %v32
  %v35 = vsub.f32 %v21, %v33
  %v36 = vsub.f32 %v22, %v34
  %v37 = vmul.f32 %v35, %v35
  %v38 = vmul.f32 %v36, %v36
  %v39 = vsel %vm25, %v37, 0.0
  %40 = vadd.xlane.f32.xlu0 %v39
  %v41 = vpop.xlane.xlu0 %40
  %v42 = vsel %vm25, %v38, 0.0
  %43 = vadd.xlane.f32.xlu0 %v42
  %v44 = vpop.xlane.xlu0 %43
  %v45 = vmul.f32 %v41, %v32
  %v46 = vmul.f32 %v44, %v32
  %v47 = vadd.f32 %v45, 1e-05
  %v48 = vadd.f32 %v46, 1e-05
  %v49 = vrsqrt.pop %v47
  %v50 = vrsqrt.pop %v48
  %v51 = vmul.f32 %v35, %v49
  %v52 = vmul.f32 %v36, %v50
  %v54 = vlaneseq
  %v55 = vshrl.u32 %v54, 7
  %v56 = vsub.s32 0, %v55
  %v57 = vrot.slane %v23, %v56
  %v59 = vmul.f32 %v51, %v57
  %v60 = vmul.f32 %v52, %v57
  %v62 = vlaneseq
  %v63 = vshrl.u32 %v62, 7
  %v64 = vsub.s32 0, %v63
  %v65 = vrot.slane %v24, %v64
  %v67 = vadd.f32 %v59, %v65
  %v68 = vadd.f32 %v60, %v65
  %v69 = vpack.c.bf16 %v68, %v67
  %v70 = vld [vmem:[%s3] sm:$0xf]
  %v71 = vld [vmem:[%s3 + $0x4] sm:$0xf]
  %v72 = vld [vmem:[%s3 + $0x8] sm:$0xf]
  %v73 = vld [vmem:[%s3 + $0xc] sm:$0xf]
  %v74 = vld [vmem:[%s4] sm:$0x1]
  %v76 = vlaneseq
  %v77 = vshrl.u32 %v76, 7
  %v78 = vsub.s32 0, %v77
  %v79 = vrot.slane %v74, %v78
  %v85 = vunpack.c.l.b16 %v70
  %v86 = vunpack.c.l.b16 %v71
  %v87 = vunpack.c.l.b16 %v72
  %v88 = vunpack.c.l.b16 %v73
  %v89 = vpack.c.b16 %v86, %v85
  %v90 = vpack.c.b16 %v88, %v87
  %v94 = vsel %vm25, %v69, 0
  %96 = vmatprep.subr.bf16.mxu0 0
  %97 = vmatpush1.bf16.msra.mxu0 %v89
  %98 = vmatprep.subr.bf16.mxu0 0
  %99 = vmatpush1.bf16.msra.mxu0 %v90
  %100 = vmatprep.subr.bf16.mxu0 0
  %101 = vmatpush1.bf16.msra.mxu0 0
  %102 = vmatprep.subr.bf16.mxu0 0
  %103 = vmatpush1.bf16.msra.mxu0 0
  %104 = vmatprep.subr.bf16.mxu0 0
  %105 = vmatpush1.bf16.msra.mxu0 0
  %106 = vmatprep.subr.bf16.mxu0 0
  %107 = vmatpush1.bf16.msra.mxu0 0
  %108 = vmatprep.subr.bf16.mxu0 0
  %109 = vmatpush1.bf16.msra.mxu0 0
  %110 = vmatprep.subr.bf16.mxu0 0
  %111 = vmatpush1.bf16.msra.mxu0 0
  %112 = vmatprep.subr.bf16.mxu0 0
  %113 = vmatpush1.bf16.msra.mxu0 0
  %114 = vmatprep.subr.bf16.mxu0 0
  %115 = vmatpush1.bf16.msra.mxu0 0
  %116 = vmatprep.subr.bf16.mxu0 0
  %117 = vmatpush1.bf16.msra.mxu0 0
  %118 = vmatprep.subr.bf16.mxu0 0
  %119 = vmatpush1.bf16.msra.mxu0 0
  %120 = vmatprep.subr.bf16.mxu0 0
  %121 = vmatpush1.bf16.msra.mxu0 0
  %122 = vmatprep.subr.bf16.mxu0 0
  %123 = vmatpush1.bf16.msra.mxu0 0
  %124 = vmatprep.subr.bf16.mxu0 0
  %125 = vmatpush1.bf16.msra.mxu0 0
  %126 = vmatprep.subr.bf16.mxu0 0
  %127 = vmatpush1.bf16.msra.mxu0 0
  %128 = vmatprep.mubr.bf16.mxu0 0
  %129 = vmatmul.mubr.bf16.gmra.mrb[0].mxu0 %v94
  %v130 = vpop.f32.mrb[0].mxu0
  %v131 = vadd.f32 %v79, %v130
  %v132 = vpop.f32.mrb[0].mxu0
  %v133 = vpop.f32.mrb[0].mxu0
  %v134 = vadd.f32 %v79, %v133
  %v135 = vpop.f32.mrb[0].mxu0
  %136 = vdwg.mxu0
  %v137 = vmul.f32 %v131, 0.5
  %v138 = vmul.f32 %v134, 0.5
  %v139 = vmul.f32 %v131, 0.044715
  %v140 = vmul.f32 %v134, 0.044715
  %v141 = vmul.f32 %v139, %v131
  %v142 = vmul.f32 %v140, %v134
  %v143 = vmul.f32 %v141, %v131
  %v144 = vmul.f32 %v142, %v134
  %v145 = vadd.f32 %v131, %v143
  %v146 = vadd.f32 %v134, %v144
  %v147 = vmul.f32 %v145, 0.7978846
  %v148 = vmul.f32 %v146, 0.7978846
  %v149 = vtanh.pop %v147
  %v150 = vtanh.pop %v148
  %v151 = vadd.f32 %v149, 1.0
  %v152 = vadd.f32 %v150, 1.0
  %v153 = vmul.f32 %v137, %v151
  %v154 = vmul.f32 %v138, %v152
  %v155 = vpack.c.bf16 %v154, %v153
  %v157 = vunpack.c.l.b16 %v155
  %v158 = vunpack.c.h.b16 %v155
  %v159 = vpack.c.b16 %v157, %v157
  %v160 = vpack.c.b16 %v158, %v158
  %163 = vst [vmem:[%s5] sm:$0xf] %v159
  %164 = vst [vmem:[%s5 + $0x4] sm:$0xf] %v160
  // Predicated region
  $region22: #{gpt2_forward.14} parent=0 // pred_check
    _
  $region23: #{gpt2_forward.14} parent=0 // pred_check_branch
    %166 = sbr.rel (0) target = $region25
  $region24: #{gpt2_forward.14} parent=0 // pred_region
    _
  $region25: #{gpt2_forward.14} parent=0 // pred_fallthru
    _
  // Predicated region
  $region26: #{gpt2_forward.14} parent=0 // pred_check
    _
  $region27: #{gpt2_forward.14} parent=0 // pred_check_branch
    %168 = sbr.rel (0) target = $region29
  $region28: #{gpt2_forward.14} parent=0 // pred_region
    _
  $region29: #{gpt2_forward.14} parent=0 // pred_fallthru
    _

// kernel: gpt2_forward.12
$region0: #{gpt2_forward.12}
  #allocation0 [shape = 'u32[]', space=smem, size = 0x4, offset = 0x4, fixed_abs, tag = 'smem constant byte address 0x4 - core index']
  #allocation1 [shape = 'u32[144,128]{1,0:T(1,128)}', space=vmem, size = 0x12000, scoped, tag = 'internal scratch']
  #allocation2 [shape = 'f32[4,8,1]{2,1,0:T(8,128)}', space=vmem, size = 0x4000, scoped, tag = 'scratch operand']
  #allocation3 [shape = 'f32[4,8,1]{2,1,0:T(8,128)}', space=vmem, size = 0x4000, scoped, tag = 'scratch operand']
  #allocation4 [shape = 'f32[4,8,8]{2,1,0:T(8,128)}', space=vmem, size = 0x4000, scoped, tag = 'scratch operand']
  %s0 = inlined_call_operand.vmem [shape: bf16[2,4,8,8], index: 0, kind: input, shape index: {}]
  %s1 = inlined_call_operand.vmem [shape: bf16[2,4,8,8], index: 1, kind: input, shape index: {}]
  %s2 = inlined_call_operand.vmem [shape: bf16[2,4,8,8], index: 2, kind: input, shape index: {}]
  %s3 = inlined_call_operand.vmem [shape: bf16[2,4,8,8], index: 3, kind: output, shape index: {}]
  %s4 = sld [smem:[#allocation0]]
  $region57: #{gpt2_forward.12} parent=0
    _
  %s6 = ssub.s32 1, %s4
  %s7 = scalar_select 0, %s6, %s4
  loop: start=0, step=1, limit=4
  $region2: #{gpt2_forward.12} parent=0 // loop_pre_header
    _
  $region3: #{gpt2_forward.12} parent=0 // loop_header
    %s9 = sphi 0, %s13
    %p10 = scmp.ge.s32.totalorder %s9, 4
    %s16 = sphi 0, %s35
    %s17 = sphi 0, %s31
    %s18 = sphi 0, %s27
    %s19 = sphi 0, %s16
    %s20 = sphi 0, %s17
    %s21 = sphi 0, %s18
    %s22 = sphi 0, %s19
    %s23 = sphi 0, %s20
    %s24 = sphi 0, %s21
    %s40 = sphi 0, %s42
    %s43 = sphi 0, %s40
    %s44 = sphi 0, %s43
    %s60 = sphi 0, %s44
    %s68 = sphi 0, %s70
    %s71 = sphi 0, %s68
    %s72 = sphi 0, %s71
    %s88 = sphi 0, %s72
    %s96 = sphi 0, %s98
    %s99 = sphi 0, %s96
    %s100 = sphi 0, %s99
    %s116 = sphi 0, %s100
    %s124 = sphi 0, %s126
    %s127 = sphi 0, %s124
    %s128 = sphi 0, %s127
    %s144 = sphi 0, %s128
  $region4: #{gpt2_forward.12} parent=0 // loop_header_branch
    %12 = sbr.rel (%p10) target = $region8
  $region5: #{gpt2_forward.12} parent=0 // loop_body
    %s14 = ssub.s32 %s9, 1
    %s15 = ssub.s32 %s9, 2
    %s25 = sadd.s32 1, %s18
    %p26 = scmp.ge.s32.totalorder %s25, 1
    %s27 = scalar_select %p26, 0, %s25
    %s28 = sadd.s32 1, %s17
    %s29 = scalar_select %p26, %s28, %s17
    %p30 = scmp.ge.s32.totalorder %s29, 1
    %s31 = scalar_select %p30, 0, %s29
    %s32 = sadd.s32 1, %s16
    %s33 = scalar_select %p30, %s32, %s16
    %p34 = scmp.ge.s32.totalorder %s33, 2
    %s35 = scalar_select %p34, 0, %s33
    %s36 = ssub.s32 %s16, %s35
    %s37 = ssub.s32 %s17, %s31
    %s38 = sor.u32 %s36, %s37
    %p39 = scmp.eq.s32.totalorder %s38, 0
    %s41 = sadd.s32 %s40, 1
    %s42 = scalar_select %p39, %s40, %s41
    %p45 = pneg %p39
    %p46 = scmp.eq.s32.totalorder %s9, 1
    %p47 = por %p45, %p46
    %p48 = scmp.ne.s32.totalorder %s40, %s43
    %p49 = scmp.eq.s32.totalorder %s9, 0
    %p50 = por %p48, %p49
    %p51 = scmp.ne.s32.totalorder %s40, %s43
    %p52 = scmp.eq.s32.totalorder %s14, 1
    %p53 = por %p51, %p52
    %p54 = scmp.ne.s32.totalorder %s43, %s44
    %p55 = scmp.eq.s32.totalorder %s14, 0
    %p56 = por %p54, %p55
    %p57 = scmp.ne.s32.totalorder %s43, %s44
    %p58 = scmp.eq.s32.totalorder %s15, 1
    %p59 = por %p57, %p58
    %p61 = scmp.ne.s32.totalorder %s44, %s60
    %p62 = scmp.eq.s32.totalorder %s15, 0
    %p63 = por %p61, %p62
    %s64 = ssub.s32 %s16, %s35
    %s65 = ssub.s32 %s18, %s27
    %s66 = sor.u32 %s64, %s65
    %p67 = scmp.eq.s32.totalorder %s66, 0
    %s69 = sadd.s32 %s68, 1
    %s70 = scalar_select %p67, %s68, %s69
    %p73 = pneg %p67
    %p74 = scmp.eq.s32.totalorder %s9, 1
    %p75 = por %p73, %p74
    %p76 = scmp.ne.s32.totalorder %s68, %s71
    %p77 = scmp.eq.s32.totalorder %s9, 0
    %p78 = por %p76, %p77
    %p79 = scmp.ne.s32.totalorder %s68, %s71
    %p80 = scmp.eq.s32.totalorder %s14, 1
    %p81 = por %p79, %p80
    %p82 = scmp.ne.s32.totalorder %s71, %s72
    %p83 = scmp.eq.s32.totalorder %s14, 0
    %p84 = por %p82, %p83
    %p85 = scmp.ne.s32.totalorder %s71, %s72
    %p86 = scmp.eq.s32.totalorder %s15, 1
    %p87 = por %p85, %p86
    %p89 = scmp.ne.s32.totalorder %s72, %s88
    %p90 = scmp.eq.s32.totalorder %s15, 0
    %p91 = por %p89, %p90
    %s92 = ssub.s32 %s16, %s35
    %s93 = ssub.s32 %s18, %s27
    %s94 = sor.u32 %s92, %s93
    %p95 = scmp.eq.s32.totalorder %s94, 0
    %s97 = sadd.s32 %s96, 1
    %s98 = scalar_select %p95, %s96, %s97
    %p101 = pneg %p95
    %p102 = scmp.eq.s32.totalorder %s9, 1
    %p103 = por %p101, %p102
    %p104 = scmp.ne.s32.totalorder %s96, %s99
    %p105 = scmp.eq.s32.totalorder %s9, 0
    %p106 = por %p104, %p105
    %p107 = scmp.ne.s32.totalorder %s96, %s99
    %p108 = scmp.eq.s32.totalorder %s14, 1
    %p109 = por %p107, %p108
    %p110 = scmp.ne.s32.totalorder %s99, %s100
    %p111 = scmp.eq.s32.totalorder %s14, 0
    %p112 = por %p110, %p111
    %p113 = scmp.ne.s32.totalorder %s99, %s100
    %p114 = scmp.eq.s32.totalorder %s15, 1
    %p115 = por %p113, %p114
    %p117 = scmp.ne.s32.totalorder %s100, %s116
    %p118 = scmp.eq.s32.totalorder %s15, 0
    %p119 = por %p117, %p118
    %s120 = ssub.s32 %s16, %s35
    %s121 = ssub.s32 %s17, %s31
    %s122 = sor.u32 %s120, %s121
    %p123 = scmp.eq.s32.totalorder %s122, 0
    %s125 = sadd.s32 %s124, 1
    %s126 = scalar_select %p123, %s124, %s125
    %p129 = pneg %p123
    %p130 = scmp.eq.s32.totalorder %s9, 1
    %p131 = por %p129, %p130
    %p132 = scmp.ne.s32.totalorder %s124, %s127
    %p133 = scmp.eq.s32.totalorder %s9, 0
    %p134 = por %p132, %p133
    %p135 = scmp.ne.s32.totalorder %s124, %s127
    %p136 = scmp.eq.s32.totalorder %s14, 1
    %p137 = por %p135, %p136
    %p138 = scmp.ne.s32.totalorder %s127, %s128
    %p139 = scmp.eq.s32.totalorder %s14, 0
    %p140 = por %p138, %p139
    %p141 = scmp.ne.s32.totalorder %s127, %s128
    %p142 = scmp.eq.s32.totalorder %s15, 1
    %p143 = por %p141, %p142
    %p145 = scmp.ne.s32.totalorder %s128, %s144
    %p146 = scmp.eq.s32.totalorder %s15, 0
    %p147 = por %p145, %p146
    %p148 = scmp.le.s32.totalorder 1, %s9
    %p149 = scmp.lt.s32.totalorder %s9, 3
    %p150 = pnand %p148, %p149
    %p151 = pneg %p150
    // Predicated region
    $region9: #{gpt2_forward.12} parent=5 // pred_check
      _
    $region10: #{gpt2_forward.12} parent=5 // pred_check_branch
      %153 = sbr.rel (%p150) target = $region12
    $region11: #{gpt2_forward.12} parent=5 // pred_region
      %s154 = ssub.s32 %s9, 1
    $region12: #{gpt2_forward.12} parent=5 // pred_fallthru
      _
    %p155 = scmp.lt.s32.totalorder %s9, 2
    // Predicated region
    $region13: #{gpt2_forward.12} parent=5 // pred_check
      %p156 = pneg %p155
    $region14: #{gpt2_forward.12} parent=5 // pred_check_branch
      %158 = sbr.rel (%p156) target = $region16
    $region15: #{gpt2_forward.12} parent=5 // pred_region
      // Predicated region
      $region17: #{gpt2_forward.12} parent=15 // pred_check
        %p159 = pneg %p50
      $region18: #{gpt2_forward.12} parent=15 // pred_check_branch
        %161 = sbr.rel (%p159) target = $region20
      $region19: #{gpt2_forward.12} parent=15 // pred_region
        %p162 = scmp.lt.s32.totalorder %s16, 1
        %s163 = scalar_select %p162, %s16, 1
        %p164 = scmp.lt.s32.totalorder %s17, 0
        %s165 = scalar_select %p164, %s17, 0
        %s166 = smul.addr %s163, 4
        %s167 = sadd.s32 %s165, %s166
        %s168 = smul.addr %s167, 4
        %s169 = scalar_lea.vmem %s0, %s168
      $region20: #{gpt2_forward.12} parent=15 // pred_fallthru
        _
      // Predicated region
      $region21: #{gpt2_forward.12} parent=15 // pred_check
        %p170 = pneg %p78
      $region22: #{gpt2_forward.12} parent=15 // pred_check_branch
        %172 = sbr.rel (%p170) target = $region24
      $region23: #{gpt2_forward.12} parent=15 // pred_region
        %p173 = scmp.lt.s32.totalorder %s16, 1
        %s174 = scalar_select %p173, %s16, 1
        %p175 = scmp.lt.s32.totalorder %s18, 0
        %s176 = scalar_select %p175, %s18, 0
        %s177 = smul.addr %s174, 4
        %s178 = sadd.s32 %s176, %s177
        %s179 = smul.addr %s178, 4
        %s180 = scalar_lea.vmem %s1, %s179
      $region24: #{gpt2_forward.12} parent=15 // pred_fallthru
        _
      // Predicated region
      $region25: #{gpt2_forward.12} parent=15 // pred_check
        %p181 = pneg %p106
      $region26: #{gpt2_forward.12} parent=15 // pred_check_branch
        %183 = sbr.rel (%p181) target = $region28
      $region27: #{gpt2_forward.12} parent=15 // pred_region
        %p184 = scmp.lt.s32.totalorder %s16, 1
        %s185 = scalar_select %p184, %s16, 1
        %p186 = scmp.lt.s32.totalorder %s18, 0
        %s187 = scalar_select %p186, %s18, 0
        %s188 = smul.addr %s185, 4
        %s189 = sadd.s32 %s187, %s188
        %s190 = smul.addr %s189, 4
        %s191 = scalar_lea.vmem %s2, %s190
      $region28: #{gpt2_forward.12} parent=15 // pred_fallthru
        _
    $region16: #{gpt2_forward.12} parent=5 // pred_fallthru
      _
    %p192 = scmp.le.s32.totalorder 1, %s9
    %p193 = scmp.lt.s32.totalorder %s9, 3
    %p194 = pnand %p192, %p193
    %p195 = pneg %p194
    // Predicated region
    $region29: #{gpt2_forward.12} parent=5 // pred_check
      _
    $region30: #{gpt2_forward.12} parent=5 // pred_check_branch
      %197 = sbr.rel (%p194) target = $region32
    $region31: #{gpt2_forward.12} parent=5 // pred_region
      %s198 = ssub.s32 %s9, 1
      %p199 = scmp.lt.s32.totalorder %s19, 1
      %s200 = scalar_select %p199, %s19, 1
      %p201 = scmp.lt.s32.totalorder %s20, 0
      %s202 = scalar_select %p201, %s20, 0
      %s203 = smul.addr %s200, 4
      %s204 = sadd.s32 %s202, %s203
      %s205 = smul.addr %s204, 4
      %s206 = scalar_lea.vmem %s0, %s205
      %p207 = pneg %p56
      %p208 = pneg %p53
      %p209 = scmp.lt.s32.totalorder %s19, 1
      %s210 = scalar_select %p209, %s19, 1
      %p211 = scmp.lt.s32.totalorder %s21, 0
      %s212 = scalar_select %p211, %s21, 0
      %s213 = smul.addr %s210, 4
      %s214 = sadd.s32 %s212, %s213
      %s215 = smul.addr %s214, 4
      %s216 = scalar_lea.vmem %s1, %s215
      %p217 = pneg %p84
      %p218 = pneg %p81
      %p219 = scmp.lt.s32.totalorder %s19, 1
      %s220 = scalar_select %p219, %s19, 1
      %p221 = scmp.lt.s32.totalorder %s21, 0
      %s222 = scalar_select %p221, %s21, 0
      %s223 = smul.addr %s220, 4
      %s224 = sadd.s32 %s222, %s223
      %s225 = smul.addr %s224, 4
      %s226 = scalar_lea.vmem %s2, %s225
      %p227 = pneg %p112
      %p228 = pneg %p109
      %p229 = pneg %p140
      %p230 = pneg %p137
      %p231 = scmp.lt.s32.totalorder %s19, 1
      %s232 = scalar_select %p231, %s19, 1
      %p233 = scmp.lt.s32.totalorder %s20, 0
      %s234 = scalar_select %p233, %s20, 0
      %s235 = smul.addr %s232, 4
      %s236 = sadd.s32 %s234, %s235
      %s237 = smul.addr %s236, 4
      %s238 = scalar_lea.vmem %s3, %s237
      %p239 = scmp.lt.s32.totalorder %s19, 1
      %s240 = scalar_select %p239, %s19, 1
      %p241 = scmp.lt.s32.totalorder %s20, 0
      %s242 = scalar_select %p241, %s20, 0
      %s243 = smul.addr %s240, 4
      %s244 = sadd.s32 %s242, %s243
      %s245 = smul.addr %s244, 4
      %s246 = scalar_lea.vmem %s0, %s245
      %p247 = scmp.lt.s32.totalorder %s19, 1
      %s248 = scalar_select %p247, %s19, 1
      %p249 = scmp.lt.s32.totalorder %s21, 0
      %s250 = scalar_select %p249, %s21, 0
      %s251 = smul.addr %s248, 4
      %s252 = sadd.s32 %s250, %s251
      %s253 = smul.addr %s252, 4
      %s254 = scalar_lea.vmem %s1, %s253
      %p255 = scmp.lt.s32.totalorder %s19, 1
      %s256 = scalar_select %p255, %s19, 1
      %p257 = scmp.lt.s32.totalorder %s21, 0
      %s258 = scalar_select %p257, %s21, 0
      %s259 = smul.addr %s256, 4
      %s260 = sadd.s32 %s258, %s259
      %s261 = smul.addr %s260, 4
      %s262 = scalar_lea.vmem %s2, %s261
      %p263 = scmp.lt.s32.totalorder %s19, 1
      %s264 = scalar_select %p263, %s19, 1
      %p265 = scmp.lt.s32.totalorder %s20, 0
      %s266 = scalar_select %p265, %s20, 0
      %s267 = smul.addr %s264, 4
      %s268 = sadd.s32 %s266, %s267
      %s269 = smul.addr %s268, 4
      %s270 = scalar_lea.vmem %s3, %s269
      %p272 = scmp.eq.s32.totalorder %s21, 0
      // Predicated region
      $region33: #{gpt2_forward.12} parent=31 // pred_check
        %p273 = pneg %p272
      $region34: #{gpt2_forward.12} parent=31 // pred_check_branch
        %275 = sbr.rel (%p273) target = $region36
      $region35: #{gpt2_forward.12} parent=31 // pred_region
        %vm276 = vcmask 7168
        %277 = vst.msk [vmem:[#allocation2] sm:$0xff] %vm276, -inf
        %278 = vst.msk [vmem:[#allocation2 + $0x8] sm:$0xff] %vm276, -inf
        %279 = vst.msk [vmem:[#allocation2 + $0x10] sm:$0xff] %vm276, -inf
        %280 = vst.msk [vmem:[#allocation2 + $0x18] sm:$0xff] %vm276, -inf
        %281 = vst.msk [vmem:[#allocation3] sm:$0xff] %vm276, 0.0
        %282 = vst.msk [vmem:[#allocation3 + $0x8] sm:$0xff] %vm276, 0.0
        %283 = vst.msk [vmem:[#allocation3 + $0x10] sm:$0xff] %vm276, 0.0
        %284 = vst.msk [vmem:[#allocation3 + $0x18] sm:$0xff] %vm276, 0.0
        %vm285 = vcmask 64512
        %286 = vst.msk [vmem:[#allocation4] sm:$0xff] %vm285, 0.0
        %287 = vst.msk [vmem:[#allocation4 + $0x8] sm:$0xff] %vm285, 0.0
        %288 = vst.msk [vmem:[#allocation4 + $0x10] sm:$0xff] %vm285, 0.0
        %289 = vst.msk [vmem:[#allocation4 + $0x18] sm:$0xff] %vm285, 0.0
      $region36: #{gpt2_forward.12} parent=31 // pred_fallthru
        _
      %s290 = smul.u32 %s21, 8
      %s291 = smul.u32 %s20, 8
      %s292 = sadd.s32 %s291, 7
      %p293 = scmp.le.s32.totalorder %s290, %s292
      // Predicated region
      $region37: #{gpt2_forward.12} parent=31 // pred_check
        %p294 = pneg %p293
      $region38: #{gpt2_forward.12} parent=31 // pred_check_branch
        %296 = sbr.rel (%p294) target = $region40
      $region39: #{gpt2_forward.12} parent=31 // pred_region
        %v297 = vld [vmem:[%s246] sm:$0xf]
        %v298 = vld [vmem:[%s246 + $0x4] sm:$0xf]
        %v299 = vld [vmem:[%s246 + $0x8] sm:$0xf]
        %v300 = vld [vmem:[%s246 + $0xc] sm:$0xf]
        %v301 = vld [vmem:[%s254] sm:$0xf]
        %v302 = vld [vmem:[%s254 + $0x4] sm:$0xf]
        %v303 = vld [vmem:[%s254 + $0x8] sm:$0xf]
        %v304 = vld [vmem:[%s254 + $0xc] sm:$0xf]
        %v305 = vld [vmem:[%s262] sm:$0xf]
        %v306 = vld [vmem:[%s262 + $0x4] sm:$0xf]
        %v307 = vld [vmem:[%s262 + $0x8] sm:$0xf]
        %v308 = vld [vmem:[%s262 + $0xc] sm:$0xf]
        %vm309 = vcmask 64512
        %v311 = vsel %vm309, %v297, 0
        %v314 = vsel %vm309, %v301, 0
        %316 = vmatprep.subr.bf16.mxu0 0
        %317 = vmatpush1.bf16.xpose.msra.mxu0 %v314
        %318 = vmatprep.subr.bf16.mxu0 0
        %319 = vmatpush1.bf16.xpose.msra.mxu0 0
        %320 = vmatprep.subr.bf16.mxu0 0
        %321 = vmatpush1.bf16.xpose.msra.mxu0 0
        %322 = vmatprep.subr.bf16.mxu0 0
        %323 = vmatpush1.bf16.xpose.msra.mxu0 0
        %324 = vmatprep.subr.bf16.mxu0 0
        %325 = vmatpush1.bf16.xpose.msra.mxu0 0
        %326 = vmatprep.subr.bf16.mxu0 0
        %327 = vmatpush1.bf16.xpose.msra.mxu0 0
        %328 = vmatprep.subr.bf16.mxu0 0
        %329 = vmatpush1.bf16.xpose.msra.mxu0 0
        %330 = vmatprep.subr.bf16.mxu0 0
        %331 = vmatpush1.bf16.xpose.msra.mxu0 0
        %332 = vmatprep.subr.bf16.mxu0 0
        %333 = vmatpush1.bf16.xpose.msra.mxu0 0
        %334 = vmatprep.subr.bf16.mxu0 0
        %335 = vmatpush1.bf16.xpose.msra.mxu0 0
        %336 = vmatprep.subr.bf16.mxu0 0
        %337 = vmatpush1.bf16.xpose.msra.mxu0 0
        %338 = vmatprep.subr.bf16.mxu0 0
        %339 = vmatpush1.bf16.xpose.msra.mxu0 0
        %340 = vmatprep.subr.bf16.mxu0 0
        %341 = vmatpush1.bf16.xpose.msra.mxu0 0
        %342 = vmatprep.subr.bf16.mxu0 0
        %343 = vmatpush1.bf16.xpose.msra.mxu0 0
        %344 = vmatprep.subr.bf16.mxu0 0
        %345 = vmatpush1.bf16.xpose.msra.mxu0 0
        %346 = vmatprep.subr.bf16.mxu0 0
        %347 = vmatpush1.bf16.xpose.msra.mxu0 0
        %348 = vmatprep.mubr.bf16.mxu0 0
        %349 = vmatmul.mubr.bf16.gmra.mrb[0].mxu0 %v311
        %v350 = vpop.f32.mrb[0].mxu0
        %v351 = vadd.f32 0.0, %v350
        %v352 = vpop.f32.mrb[0].mxu0
        %v353 = vpop.f32.mrb[0].mxu0
        %v354 = vpop.f32.mrb[0].mxu0
        %355 = vdwg.mxu0
        %v357 = vsel %vm309, %v298, 0
        %v360 = vsel %vm309, %v302, 0
        %362 = vmatprep.subr.bf16.mxu0 0
        %363 = vmatpush1.bf16.xpose.msra.mxu0 %v360
        %364 = vmatprep.subr.bf16.mxu0 0
        %365 = vmatpush1.bf16.xpose.msra.mxu0 0
        %366 = vmatprep.subr.bf16.mxu0 0
        %367 = vmatpush1.bf16.xpose.msra.mxu0 0
        %368 = vmatprep.subr.bf16.mxu0 0
        %369 = vmatpush1.bf16.xpose.msra.mxu0 0
        %370 = vmatprep.subr.bf16.mxu0 0
        %371 = vmatpush1.bf16.xpose.msra.mxu0 0
        %372 = vmatprep.subr.bf16.mxu0 0
        %373 = vmatpush1.bf16.xpose.msra.mxu0 0
        %374 = vmatprep.subr.bf16.mxu0 0
        %375 = vmatpush1.bf16.xpose.msra.mxu0 0
        %376 = vmatprep.subr.bf16.mxu0 0
        %377 = vmatpush1.bf16.xpose.msra.mxu0 0
        %378 = vmatprep.subr.bf16.mxu0 0
        %379 = vmatpush1.bf16.xpose.msra.mxu0 0
        %380 = vmatprep.subr.bf16.mxu0 0
        %381 = vmatpush1.bf16.xpose.msra.mxu0 0
        %382 = vmatprep.subr.bf16.mxu0 0
        %383 = vmatpush1.bf16.xpose.msra.mxu0 0
        %384 = vmatprep.subr.bf16.mxu0 0
        %385 = vmatpush1.bf16.xpose.msra.mxu0 0
        %386 = vmatprep.subr.bf16.mxu0 0
        %387 = vmatpush1.bf16.xpose.msra.mxu0 0
        %388 = vmatprep.subr.bf16.mxu0 0
        %389 = vmatpush1.bf16.xpose.msra.mxu0 0
        %390 = vmatprep.subr.bf16.mxu0 0
        %391 = vmatpush1.bf16.xpose.msra.mxu0 0
        %392 = vmatprep.subr.bf16.mxu0 0
        %393 = vmatpush1.bf16.xpose.msra.mxu0 0
        %394 = vmatprep.mubr.bf16.mxu0 0
        %395 = vmatmul.mubr.bf16.gmra.mrb[0].mxu0 %v357
        %v396 = vpop.f32.mrb[0].mxu0
        %v397 = vadd.f32 0.0, %v396
        %v398 = vpop.f32.mrb[0].mxu0
        %v399 = vpop.f32.mrb[0].mxu0
        %v400 = vpop.f32.mrb[0].mxu0
        %401 = vdwg.mxu0
        %v403 = vsel %vm309, %v299, 0
        %v406 = vsel %vm309, %v303, 0
        %408 = vmatprep.subr.bf16.mxu0 0
        %409 = vmatpush1.bf16.xpose.msra.mxu0 %v406
        %410 = vmatprep.subr.bf16.mxu0 0
        %411 = vmatpush1.bf16.xpose.msra.mxu0 0
        %412 = vmatprep.subr.bf16.mxu0 0
        %413 = vmatpush1.bf16.xpose.msra.mxu0 0
        %414 = vmatprep.subr.bf16.mxu0 0
        %415 = vmatpush1.bf16.xpose.msra.mxu0 0
        %416 = vmatprep.subr.bf16.mxu0 0
        %417 = vmatpush1.bf16.xpose.msra.mxu0 0
        %418 = vmatprep.subr.bf16.mxu0 0
        %419 = vmatpush1.bf16.xpose.msra.mxu0 0
        %420 = vmatprep.subr.bf16.mxu0 0
        %421 = vmatpush1.bf16.xpose.msra.mxu0 0
        %422 = vmatprep.subr.bf16.mxu0 0
        %423 = vmatpush1.bf16.xpose.msra.mxu0 0
        %424 = vmatprep.subr.bf16.mxu0 0
        %425 = vmatpush1.bf16.xpose.msra.mxu0 0
        %426 = vmatprep.subr.bf16.mxu0 0
        %427 = vmatpush1.bf16.xpose.msra.mxu0 0
        %428 = vmatprep.subr.bf16.mxu0 0
        %429 = vmatpush1.bf16.xpose.msra.mxu0 0
        %430 = vmatprep.subr.bf16.mxu0 0
        %431 = vmatpush1.bf16.xpose.msra.mxu0 0
        %432 = vmatprep.subr.bf16.mxu0 0
        %433 = vmatpush1.bf16.xpose.msra.mxu0 0
        %434 = vmatprep.subr.bf16.mxu0 0
        %435 = vmatpush1.bf16.xpose.msra.mxu0 0
        %436 = vmatprep.subr.bf16.mxu0 0
        %437 = vmatpush1.bf16.xpose.msra.mxu0 0
        %438 = vmatprep.subr.bf16.mxu0 0
        %439 = vmatpush1.bf16.xpose.msra.mxu0 0
        %440 = vmatprep.mubr.bf16.mxu0 0
        %441 = vmatmul.mubr.bf16.gmra.mrb[0].mxu0 %v403
        %v442 = vpop.f32.mrb[0].mxu0
        %v443 = vadd.f32 0.0, %v442
        %v444 = vpop.f32.mrb[0].mxu0
        %v445 = vpop.f32.mrb[0].mxu0
        %v446 = vpop.f32.mrb[0].mxu0
        %447 = vdwg.mxu0
        %v449 = vsel %vm309, %v300, 0
        %v452 = vsel %vm309, %v304, 0
        %454 = vmatprep.subr.bf16.mxu0 0
        %455 = vmatpush1.bf16.xpose.msra.mxu0 %v452
        %456 = vmatprep.subr.bf16.mxu0 0
        %457 = vmatpush1.bf16.xpose.msra.mxu0 0
        %458 = vmatprep.subr.bf16.mxu0 0
        %459 = vmatpush1.bf16.xpose.msra.mxu0 0
        %460 = vmatprep.subr.bf16.mxu0 0
        %461 = vmatpush1.bf16.xpose.msra.mxu0 0
        %462 = vmatprep.subr.bf16.mxu0 0
        %463 = vmatpush1.bf16.xpose.msra.mxu0 0
        %464 = vmatprep.subr.bf16.mxu0 0
        %465 = vmatpush1.bf16.xpose.msra.mxu0 0
        %466 = vmatprep.subr.bf16.mxu0 0
        %467 = vmatpush1.bf16.xpose.msra.mxu0 0
        %468 = vmatprep.subr.bf16.mxu0 0
        %469 = vmatpush1.bf16.xpose.msra.mxu0 0
        %470 = vmatprep.subr.bf16.mxu0 0
        %471 = vmatpush1.bf16.xpose.msra.mxu0 0
        %472 = vmatprep.subr.bf16.mxu0 0
        %473 = vmatpush1.bf16.xpose.msra.mxu0 0
        %474 = vmatprep.subr.bf16.mxu0 0
        %475 = vmatpush1.bf16.xpose.msra.mxu0 0
        %476 = vmatprep.subr.bf16.mxu0 0
        %477 = vmatpush1.bf16.xpose.msra.mxu0 0
        %478 = vmatprep.subr.bf16.mxu0 0
        %479 = vmatpush1.bf16.xpose.msra.mxu0 0
        %480 = vmatprep.subr.bf16.mxu0 0
        %481 = vmatpush1.bf16.xpose.msra.mxu0 0
        %482 = vmatprep.subr.bf16.mxu0 0
        %483 = vmatpush1.bf16.xpose.msra.mxu0 0
        %484 = vmatprep.subr.bf16.mxu0 0
        %485 = vmatpush1.bf16.xpose.msra.mxu0 0
        %486 = vmatprep.mubr.bf16.mxu0 0
        %487 = vmatmul.mubr.bf16.gmra.mrb[0].mxu0 %v449
        %v488 = vpop.f32.mrb[0].mxu0
        %v489 = vadd.f32 0.0, %v488
        %v490 = vpop.f32.mrb[0].mxu0
        %v491 = vpop.f32.mrb[0].mxu0
        %v492 = vpop.f32.mrb[0].mxu0
        %493 = vdwg.mxu0
        %v494 = vmul.f32 %v351, 0.35355338
        %v495 = vmul.f32 %v397, 0.35355338
        %v496 = vmul.f32 %v443, 0.35355338
        %v497 = vmul.f32 %v489, 0.35355338
        %v498 = vlaneseq
        %v499 = vshrl.u32 %v498, 7
        %v500 = vstv %s291
        %v501 = vadd.s32 %v500, %v499
        %v502 = vlaneseq
        %v503 = vand.u32 %v502, 127
        %v504 = vstv %s290
        %v505 = vadd.s32 %v504, %v503
        %vm506 = vcmp.ge.s32.totalorder %v501, %v505
        %v507 = vsel %vm506, 1, 0
        %vm508 = vcmp.eq.s32.totalorder %v507, 1
        %v509 = vsel %vm508, %v494, -1e+30
        %v510 = vsel %vm508, %v495, -1e+30
        %v511 = vsel %vm508, %v496, -1e+30
        %v512 = vsel %vm508, %v497, -1e+30
        %v513 = vld [vmem:[#allocation2] sm:$0xff]
        %v514 = vld [vmem:[#allocation2 + $0x8] sm:$0xff]
        %v515 = vld [vmem:[#allocation2 + $0x10] sm:$0xff]
        %v516 = vld [vmem:[#allocation2 + $0x18] sm:$0xff]
        %v517 = vsel %vm309, %v509, -inf
        %518 = vmax.xlane.f32.xlu0 %v517
        %v519 = vpop.xlane.xlu0 %518
        %v520 = vsel %vm309, %v510, -inf
        %521 = vmax.xlane.f32.xlu0 %v520
        %v522 = vpop.xlane.xlu0 %521
        %v523 = vsel %vm309, %v511, -inf
        %524 = vmax.xlane.f32.xlu0 %v523
        %v525 = vpop.xlane.xlu0 %524
        %v526 = vsel %vm309, %v512, -inf
        %527 = vmax.xlane.f32.xlu0 %v526
        %v528 = vpop.xlane.xlu0 %527
        %v529 = vmax.f32 %v513, %v519
        %v530 = vmax.f32 %v514, %v522
        %v531 = vmax.f32 %v515, %v525
        %v532 = vmax.f32 %v516, %v528
        %v533 = vsub.f32 %v513, %v529
        %v534 = vsub.f32 %v514, %v530
        %v535 = vsub.f32 %v515, %v531
        %v536 = vsub.f32 %v516, %v532
        %v537 = vmul.f32 %v533, 1.442695
        %v538 = vpow.pop %v537
        %v539 = vmul.f32 %v534, 1.442695
        %v540 = vpow.pop %v539
        %v541 = vmul.f32 %v535, 1.442695
        %v542 = vpow.pop %v541
        %v543 = vmul.f32 %v536, 1.442695
        %v544 = vpow.pop %v543
        %546 = vset.pattern.permute.xlu0 0
        %547 = vperm.xlu0 %546, %v529
        %v548 = vpop.permute.xlu0 %547
        %551 = vset.pattern.permute.xlu0 0
        %552 = vperm.xlu0 %551, %v530
        %v553 = vpop.permute.xlu0 %552
        %556 = vset.pattern.permute.xlu0 0
        %557 = vperm.xlu0 %556, %v531
        %v558 = vpop.permute.xlu0 %557
        %561 = vset.pattern.permute.xlu0 0
        %562 = vperm.xlu0 %561, %v532
        %v563 = vpop.permute.xlu0 %562
        %v565 = vsub.f32 %v509, %v548
        %v566 = vsub.f32 %v510, %v553
        %v567 = vsub.f32 %v511, %v558
        %v568 = vsub.f32 %v512, %v563
        %v569 = vmul.f32 %v565, 1.442695
        %v570 = vpow.pop %v569
        %v571 = vmul.f32 %v566, 1.442695
        %v572 = vpow.pop %v571
        %v573 = vmul.f32 %v567, 1.442695
        %v574 = vpow.pop %v573
        %v575 = vmul.f32 %v568, 1.442695
        %v576 = vpow.pop %v575
        %v577 = vld [vmem:[#allocation3] sm:$0xff]
        %v578 = vld [vmem:[#allocation3 + $0x8] sm:$0xff]
        %v579 = vld [vmem:[#allocation3 + $0x10] sm:$0xff]
        %v580 = vld [vmem:[#allocation3 + $0x18] sm:$0xff]
        %v581 = vmul.f32 %v538, %v577
        %v582 = vmul.f32 %v540, %v578
        %v583 = vmul.f32 %v542, %v579
        %v584 = vmul.f32 %v544, %v580
        %v585 = vsel %vm309, %v570, 0.0
        %586 = vadd.xlane.f32.xlu0 %v585
        %v587 = vpop.xlane.xlu0 %586
        %v588 = vsel %vm309, %v572, 0.0
        %589 = vadd.xlane.f32.xlu0 %v588
        %v590 = vpop.xlane.xlu0 %589
        %v591 = vsel %vm309, %v574, 0.0
        %592 = vadd.xlane.f32.xlu0 %v591
        %v593 = vpop.xlane.xlu0 %592
        %v594 = vsel %vm309, %v576, 0.0
        %595 = vadd.xlane.f32.xlu0 %v594
        %v596 = vpop.xlane.xlu0 %595
        %v597 = vadd.f32 %v581, %v587
        %v598 = vadd.f32 %v582, %v590
        %v599 = vadd.f32 %v583, %v593
        %v600 = vadd.f32 %v584, %v596
        %vm601 = vcmask 7168
        %602 = vst.msk [vmem:[#allocation3] sm:$0xff] %vm601, %v597
        %603 = vst.msk [vmem:[#allocation3 + $0x8] sm:$0xff] %vm601, %v598
        %604 = vst.msk [vmem:[#allocation3 + $0x10] sm:$0xff] %vm601, %v599
        %605 = vst.msk [vmem:[#allocation3 + $0x18] sm:$0xff] %vm601, %v600
        %v606 = vld [vmem:[#allocation4] sm:$0xff]
        %v607 = vld [vmem:[#allocation4 + $0x8] sm:$0xff]
        %v608 = vld [vmem:[#allocation4 + $0x10] sm:$0xff]
        %v609 = vld [vmem:[#allocation4 + $0x18] sm:$0xff]
        %611 = vset.pattern.permute.xlu0 0
        %612 = vperm.xlu0 %611, %v538
        %v613 = vpop.permute.xlu0 %612
        %616 = vset.pattern.permute.xlu0 0
        %617 = vperm.xlu0 %616, %v540
        %v618 = vpop.permute.xlu0 %617
        %621 = vset.pattern.permute.xlu0 0
        %622 = vperm.xlu0 %621, %v542
        %v623 = vpop.permute.xlu0 %622
        %626 = vset.pattern.permute.xlu0 0
        %627 = vperm.xlu0 %626, %v544
        %v628 = vpop.permute.xlu0 %627
        %v630 = vmul.f32 %v613, %v606
        %v631 = vmul.f32 %v618, %v607
        %v632 = vmul.f32 %v623, %v608
        %v633 = vmul.f32 %v628, %v609
        %v634 = vpack.c.bf16 %v570, %v570
        %v635 = vpack.c.bf16 %v572, %v572
        %v636 = vpack.c.bf16 %v574, %v574
        %v637 = vpack.c.bf16 %v576, %v576
        %v639 = vsel %vm309, %v634, 0
        %vm641 = vcmask 1043456
        %v643 = vsel %vm641, %v305, 0
        %645 = vmatprep.subr.bf16.mxu0 0
        %646 = vmatpush1.bf16.msra.mxu0 %v643
        %647 = vmatprep.subr.bf16.mxu0 0
        %648 = vmatpush1.bf16.msra.mxu0 0
        %649 = vmatprep.subr.bf16.mxu0 0
        %650 = vmatpush1.bf16.msra.mxu0 0
        %651 = vmatprep.subr.bf16.mxu0 0
        %652 = vmatpush1.bf16.msra.mxu0 0
        %653 = vmatprep.subr.bf16.mxu0 0
        %654 = vmatpush1.bf16.msra.mxu0 0
        %655 = vmatprep.subr.bf16.mxu0 0
        %656 = vmatpush1.bf16.msra.mxu0 0
        %657 = vmatprep.subr.bf16.mxu0 0
        %658 = vmatpush1.bf16.msra.mxu0 0
        %659 = vmatprep.subr.bf16.mxu0 0
        %660 = vmatpush1.bf16.msra.mxu0 0
        %661 = vmatprep.subr.bf16.mxu0 0
        %662 = vmatpush1.bf16.msra.mxu0 0
        %663 = vmatprep.subr.bf16.mxu0 0
        %664 = vmatpush1.bf16.msra.mxu0 0
        %665 = vmatprep.subr.bf16.mxu0 0
        %666 = vmatpush1.bf16.msra.mxu0 0
        %667 = vmatprep.subr.bf16.mxu0 0
        %668 = vmatpush1.bf16.msra.mxu0 0
        %669 = vmatprep.subr.bf16.mxu0 0
        %670 = vmatpush1.bf16.msra.mxu0 0
        %671 = vmatprep.subr.bf16.mxu0 0
        %672 = vmatpush1.bf16.msra.mxu0 0
        %673 = vmatprep.subr.bf16.mxu0 0
        %674 = vmatpush1.bf16.msra.mxu0 0
        %675 = vmatprep.subr.bf16.mxu0 0
        %676 = vmatpush1.bf16.msra.mxu0 0
        %677 = vmatprep.mubr.bf16.mxu0 0
        %678 = vmatmul.mubr.bf16.gmra.mrb[0].mxu0 %v639
        %v679 = vpop.f32.mrb[0].mxu0
        %v680 = vadd.f32 0.0, %v679
        %v681 = vpop.f32.mrb[0].mxu0
        %v682 = vpop.f32.mrb[0].mxu0
        %v683 = vpop.f32.mrb[0].mxu0
        %684 = vdwg.mxu0
        %v686 = vsel %vm309, %v635, 0
        %v689 = vsel %vm641, %v306, 0
        %691 = vmatprep.subr.bf16.mxu0 0
        %692 = vmatpush1.bf16.msra.mxu0 %v689
        %693 = vmatprep.subr.bf16.mxu0 0
        %694 = vmatpush1.bf16.msra.mxu0 0
        %695 = vmatprep.subr.bf16.mxu0 0
        %696 = vmatpush1.bf16.msra.mxu0 0
        %697 = vmatprep.subr.bf16.mxu0 0
        %698 = vmatpush1.bf16.msra.mxu0 0
        %699 = vmatprep.subr.bf16.mxu0 0
        %700 = vmatpush1.bf16.msra.mxu0 0
        %701 = vmatprep.subr.bf16.mxu0 0
        %702 = vmatpush1.bf16.msra.mxu0 0
        %703 = vmatprep.subr.bf16.mxu0 0
        %704 = vmatpush1.bf16.msra.mxu0 0
        %705 = vmatprep.subr.bf16.mxu0 0
        %706 = vmatpush1.bf16.msra.mxu0 0
        %707 = vmatprep.subr.bf16.mxu0 0
        %708 = vmatpush1.bf16.msra.mxu0 0
        %709 = vmatprep.subr.bf16.mxu0 0
        %710 = vmatpush1.bf16.msra.mxu0 0
        %711 = vmatprep.subr.bf16.mxu0 0
        %712 = vmatpush1.bf16.msra.mxu0 0
        %713 = vmatprep.subr.bf16.mxu0 0
        %714 = vmatpush1.bf16.msra.mxu0 0
        %715 = vmatprep.subr.bf16.mxu0 0
        %716 = vmatpush1.bf16.msra.mxu0 0
        %717 = vmatprep.subr.bf16.mxu0 0
        %718 = vmatpush1.bf16.msra.mxu0 0
        %719 = vmatprep.subr.bf16.mxu0 0
        %720 = vmatpush1.bf16.msra.mxu0 0
        %721 = vmatprep.subr.bf16.mxu0 0
        %722 = vmatpush1.bf16.msra.mxu0 0
        %723 = vmatprep.mubr.bf16.mxu0 0
        %724 = vmatmul.mubr.bf16.gmra.mrb[0].mxu0 %v686
        %v725 = vpop.f32.mrb[0].mxu0
        %v726 = vadd.f32 0.0, %v725
        %v727 = vpop.f32.mrb[0].mxu0
        %v728 = vpop.f32.mrb[0].mxu0
        %v729 = vpop.f32.mrb[0].mxu0
        %730 = vdwg.mxu0
        %v732 = vsel %vm309, %v636, 0
        %v735 = vsel %vm641, %v307, 0
        %737 = vmatprep.subr.bf16.mxu0 0
        %738 = vmatpush1.bf16.msra.mxu0 %v735
        %739 = vmatprep.subr.bf16.mxu0 0
        %740 = vmatpush1.bf16.msra.mxu0 0
        %741 = vmatprep.subr.bf16.mxu0 0
        %742 = vmatpush1.bf16.msra.mxu0 0
        %743 = vmatprep.subr.bf16.mxu0 0
        %744 = vmatpush1.bf16.msra.mxu0 0
        %745 = vmatprep.subr.bf16.mxu0 0
        %746 = vmatpush1.bf16.msra.mxu0 0
        %747 = vmatprep.subr.bf16.mxu0 0
        %748 = vmatpush1.bf16.msra.mxu0 0
        %749 = vmatprep.subr.bf16.mxu0 0
        %750 = vmatpush1.bf16.msra.mxu0 0
        %751 = vmatprep.subr.bf16.mxu0 0
        %752 = vmatpush1.bf16.msra.mxu0 0
        %753 = vmatprep.subr.bf16.mxu0 0
        %754 = vmatpush1.bf16.msra.mxu0 0
        %755 = vmatprep.subr.bf16.mxu0 0
        %756 = vmatpush1.bf16.msra.mxu0 0
        %757 = vmatprep.subr.bf16.mxu0 0
        %758 = vmatpush1.bf16.msra.mxu0 0
        %759 = vmatprep.subr.bf16.mxu0 0
        %760 = vmatpush1.bf16.msra.mxu0 0
        %761 = vmatprep.subr.bf16.mxu0 0
        %762 = vmatpush1.bf16.msra.mxu0 0
        %763 = vmatprep.subr.bf16.mxu0 0
        %764 = vmatpush1.bf16.msra.mxu0 0
        %765 = vmatprep.subr.bf16.mxu0 0
        %766 = vmatpush1.bf16.msra.mxu0 0
        %767 = vmatprep.subr.bf16.mxu0 0
        %768 = vmatpush1.bf16.msra.mxu0 0
        %769 = vmatprep.mubr.bf16.mxu0 0
        %770 = vmatmul.mubr.bf16.gmra.mrb[0].mxu0 %v732
        %v771 = vpop.f32.mrb[0].mxu0
        %v772 = vadd.f32 0.0, %v771
        %v773 = vpop.f32.mrb[0].mxu0
        %v774 = vpop.f32.mrb[0].mxu0
        %v775 = vpop.f32.mrb[0].mxu0
        %776 = vdwg.mxu0
        %v778 = vsel %vm309, %v637, 0
        %v781 = vsel %vm641, %v308, 0
        %783 = vmatprep.subr.bf16.mxu0 0
        %784 = vmatpush1.bf16.msra.mxu0 %v781
        %785 = vmatprep.subr.bf16.mxu0 0
        %786 = vmatpush1.bf16.msra.mxu0 0
        %787 = vmatprep.subr.bf16.mxu0 0
        %788 = vmatpush1.bf16.msra.mxu0 0
        %789 = vmatprep.subr.bf16.mxu0 0
        %790 = vmatpush1.bf16.msra.mxu0 0
        %791 = vmatprep.subr.bf16.mxu0 0
        %792 = vmatpush1.bf16.msra.mxu0 0
        %793 = vmatprep.subr.bf16.mxu0 0
        %794 = vmatpush1.bf16.msra.mxu0 0
        %795 = vmatprep.subr.bf16.mxu0 0
        %796 = vmatpush1.bf16.msra.mxu0 0
        %797 = vmatprep.subr.bf16.mxu0 0
        %798 = vmatpush1.bf16.msra.mxu0 0
        %799 = vmatprep.subr.bf16.mxu0 0
        %800 = vmatpush1.bf16.msra.mxu0 0
        %801 = vmatprep.subr.bf16.mxu0 0
        %802 = vmatpush1.bf16.msra.mxu0 0
        %803 = vmatprep.subr.bf16.mxu0 0
        %804 = vmatpush1.bf16.msra.mxu0 0
        %805 = vmatprep.subr.bf16.mxu0 0
        %806 = vmatpush1.bf16.msra.mxu0 0
        %807 = vmatprep.subr.bf16.mxu0 0
        %808 = vmatpush1.bf16.msra.mxu0 0
        %809 = vmatprep.subr.bf16.mxu0 0
        %810 = vmatpush1.bf16.msra.mxu0 0
        %811 = vmatprep.subr.bf16.mxu0 0
        %812 = vmatpush1.bf16.msra.mxu0 0
        %813 = vmatprep.subr.bf16.mxu0 0
        %814 = vmatpush1.bf16.msra.mxu0 0
        %815 = vmatprep.mubr.bf16.mxu0 0
        %816 = vmatmul.mubr.bf16.gmra.mrb[0].mxu0 %v778
        %v817 = vpop.f32.mrb[0].mxu0
        %v818 = vadd.f32 0.0, %v817
        %v819 = vpop.f32.mrb[0].mxu0
        %v820 = vpop.f32.mrb[0].mxu0
        %v821 = vpop.f32.mrb[0].mxu0
        %822 = vdwg.mxu0
        %v823 = vadd.f32 %v630, %v680
        %v824 = vadd.f32 %v631, %v726
        %v825 = vadd.f32 %v632, %v772
        %v826 = vadd.f32 %v633, %v818
        %827 = vst.msk [vmem:[#allocation4] sm:$0xff] %vm309, %v823
        %828 = vst.msk [vmem:[#allocation4 + $0x8] sm:$0xff] %vm309, %v824
        %829 = vst.msk [vmem:[#allocation4 + $0x10] sm:$0xff] %vm309, %v825
        %830 = vst.msk [vmem:[#allocation4 + $0x18] sm:$0xff] %vm309, %v826
        %831 = vst.msk [vmem:[#allocation2] sm:$0xff] %vm601, %v529
        %832 = vst.msk [vmem:[#allocation2 + $0x8] sm:$0xff] %vm601, %v530
        %833 = vst.msk [vmem:[#allocation2 + $0x10] sm:$0xff] %vm601, %v531
        %834 = vst.msk [vmem:[#allocation2 + $0x18] sm:$0xff] %vm601, %v532
      $region40: #{gpt2_forward.12} parent=31 // pred_fallthru
        _
      // Predicated region
      $region41: #{gpt2_forward.12} parent=31 // pred_check
        %p835 = pneg %p272
      $region42: #{gpt2_forward.12} parent=31 // pred_check_branch
        %837 = sbr.rel (%p835) target = $region44
      $region43: #{gpt2_forward.12} parent=31 // pred_region
        %v838 = vld [vmem:[#allocation4] sm:$0xff]
        %v839 = vld [vmem:[#allocation4 + $0x8] sm:$0xff]
        %v840 = vld [vmem:[#allocation4 + $0x10] sm:$0xff]
        %v841 = vld [vmem:[#allocation4 + $0x18] sm:$0xff]
        %v842 = vld [vmem:[#allocation3] sm:$0xff]
        %v843 = vld [vmem:[#allocation3 + $0x8] sm:$0xff]
        %v844 = vld [vmem:[#allocation3 + $0x10] sm:$0xff]
        %v845 = vld [vmem:[#allocation3 + $0x18] sm:$0xff]
        %v846 = vrcp.pop %v842
        %v847 = vrcp.pop %v843
        %v848 = vrcp.pop %v844
        %v849 = vrcp.pop %v845
        %851 = vset.pattern.permute.xlu0 0
        %852 = vperm.xlu0 %851, %v846
        %v853 = vpop.permute.xlu0 %852
        %856 = vset.pattern.permute.xlu0 0
        %857 = vperm.xlu0 %856, %v847
        %v858 = vpop.permute.xlu0 %857
        %861 = vset.pattern.permute.xlu0 0
        %862 = vperm.xlu0 %861, %v848
        %v863 = vpop.permute.xlu0 %862
        %866 = vset.pattern.permute.xlu0 0
        %867 = vperm.xlu0 %866, %v849
        %v868 = vpop.permute.xlu0 %867
        %v870 = vmul.f32 %v838, %v853
        %v871 = vmul.f32 %v839, %v858
        %v872 = vmul.f32 %v840, %v863
        %v873 = vmul.f32 %v841, %v868
        %v874 = vpack.c.bf16 %v870, %v870
        %v875 = vpack.c.bf16 %v871, %v871
        %v876 = vpack.c.bf16 %v872, %v872
        %v877 = vpack.c.bf16 %v873, %v873
        %vm878 = vcmask 60416
        %879 = vst.msk [vmem:[%s270] sm:$0xf] %vm878, %v874
        %880 = vst.msk [vmem:[%s270 + $0x4] sm:$0xf] %vm878, %v875
        %881 = vst.msk [vmem:[%s270 + $0x8] sm:$0xf] %vm878, %v876
        %882 = vst.msk [vmem:[%s270 + $0xc] sm:$0xf] %vm878, %v877
      $region44: #{gpt2_forward.12} parent=31 // pred_fallthru
        _
      %p883 = scmp.lt.s32.totalorder %s19, 1
      %s884 = scalar_select %p883, %s19, 1
      %p885 = scmp.lt.s32.totalorder %s20, 0
      %s886 = scalar_select %p885, %s20, 0
      %s887 = smul.addr %s884, 4
      %s888 = sadd.s32 %s886, %s887
      %s889 = smul.addr %s888, 4
      %s890 = scalar_lea.vmem %s3, %s889
      // Predicated region
      $region45: #{gpt2_forward.12} parent=31 // pred_check
        %p891 = pneg %p137
      $region46: #{gpt2_forward.12} parent=31 // pred_check_branch
        %893 = sbr.rel (%p891) target = $region48
      $region47: #{gpt2_forward.12} parent=31 // pred_region
        _
      $region48: #{gpt2_forward.12} parent=31 // pred_fallthru
        _
    $region32: #{gpt2_forward.12} parent=5 // pred_fallthru
      _
    %p894 = scmp.le.s32.totalorder 2, %s9
    // Predicated region
    $region49: #{gpt2_forward.12} parent=5 // pred_check
      %p895 = pneg %p894
    $region50: #{gpt2_forward.12} parent=5 // pred_check_branch
      %897 = sbr.rel (%p895) target = $region52
    $region51: #{gpt2_forward.12} parent=5 // pred_region
      %s898 = ssub.s32 %s9, 2
      // Predicated region
      $region53: #{gpt2_forward.12} parent=51 // pred_check
        %p899 = pneg %p143
      $region54: #{gpt2_forward.12} parent=51 // pred_check_branch
        %901 = sbr.rel (%p899) target = $region56
      $region55: #{gpt2_forward.12} parent=51 // pred_region
        %p902 = scmp.lt.s32.totalorder %s22, 1
        %s903 = scalar_select %p902, %s22, 1
        %p904 = scmp.lt.s32.totalorder %s23, 0
        %s905 = scalar_select %p904, %s23, 0
        %s906 = smul.addr %s903, 4
        %s907 = sadd.s32 %s905, %s906
        %s908 = smul.addr %s907, 4
        %s909 = scalar_lea.vmem %s3, %s908
      $region56: #{gpt2_forward.12} parent=51 // pred_fallthru
        _
    $region52: #{gpt2_forward.12} parent=5 // pred_fallthru
      _
  $region6: #{gpt2_forward.12} parent=0 // loop_footer
    %s13 = sadd.s32 1, %s9
  $region7: #{gpt2_forward.12} parent=0 // loop_footer_branch
    %8 = sbr.rel target = $region3
  $region8: #{gpt2_forward.12} parent=0 // loop_exit
    _

// kernel: gpt2_forward.15
$region0: #{gpt2_forward.15}
  #allocation0 [shape = 'u32[]', space=smem, size = 0x4, offset = 0x4, fixed_abs, tag = 'smem constant byte address 0x4 - core index']
  #allocation1 [shape = 'u32[144,128]{1,0:T(1,128)}', space=vmem, size = 0x12000, scoped, tag = 'internal scratch']
  %s0 = inlined_call_operand.vmem [shape: bf16[16,128], index: 0, kind: input, shape index: {}]
  %s1 = inlined_call_operand.vmem [shape: bf16[128,32], index: 1, kind: input, shape index: {}]
  %s2 = inlined_call_operand.vmem [shape: f32[1,32], index: 2, kind: input, shape index: {}]
  %s3 = inlined_call_operand.vmem [shape: f32[16,32], index: 3, kind: input, shape index: {}]
  %s4 = inlined_call_operand.vmem [shape: f32[16,32], index: 4, kind: output, shape index: {}]
  %s5 = sld [smem:[#allocation0]]
  $region26: #{gpt2_forward.15} parent=0
    _
  %s7 = ssub.s32 1, %s5
  %s8 = scalar_select 0, %s7, %s5
  // Predicated region
  $region2: #{gpt2_forward.15} parent=0 // pred_check
    _
  $region3: #{gpt2_forward.15} parent=0 // pred_check_branch
    %10 = sbr.rel (0) target = $region5
  $region4: #{gpt2_forward.15} parent=0 // pred_region
    _
  $region5: #{gpt2_forward.15} parent=0 // pred_fallthru
    _
  // Predicated region
  $region6: #{gpt2_forward.15} parent=0 // pred_check
    _
  $region7: #{gpt2_forward.15} parent=0 // pred_check_branch
    %12 = sbr.rel (0) target = $region9
  $region8: #{gpt2_forward.15} parent=0 // pred_region
    _
  $region9: #{gpt2_forward.15} parent=0 // pred_fallthru
    _
  // Predicated region
  $region10: #{gpt2_forward.15} parent=0 // pred_check
    _
  $region11: #{gpt2_forward.15} parent=0 // pred_check_branch
    %14 = sbr.rel (0) target = $region13
  $region12: #{gpt2_forward.15} parent=0 // pred_region
    _
  $region13: #{gpt2_forward.15} parent=0 // pred_fallthru
    _
  // Predicated region
  $region14: #{gpt2_forward.15} parent=0 // pred_check
    _
  $region15: #{gpt2_forward.15} parent=0 // pred_check_branch
    %16 = sbr.rel (0) target = $region17
  $region16: #{gpt2_forward.15} parent=0 // pred_region
    _
  $region17: #{gpt2_forward.15} parent=0 // pred_fallthru
    _
  %v18 = vld [vmem:[%s0] sm:$0xf]
  %v19 = vld [vmem:[%s0 + $0x4] sm:$0xf]
  %v20 = vld [vmem:[%s1] sm:$0xf]
  %v21 = vld [vmem:[%s1 + $0x4] sm:$0xf]
  %v22 = vld [vmem:[%s1 + $0x8] sm:$0xf]
  %v23 = vld [vmem:[%s1 + $0xc] sm:$0xf]
  %v24 = vld [vmem:[%s1 + $0x10] sm:$0xf]
  %v25 = vld [vmem:[%s1 + $0x14] sm:$0xf]
  %v26 = vld [vmem:[%s1 + $0x18] sm:$0xf]
  %v27 = vld [vmem:[%s1 + $0x1c] sm:$0xf]
  %v28 = vld [vmem:[%s1 + $0x20] sm:$0xf]
  %v29 = vld [vmem:[%s1 + $0x24] sm:$0xf]
  %v30 = vld [vmem:[%s1 + $0x28] sm:$0xf]
  %v31 = vld [vmem:[%s1 + $0x2c] sm:$0xf]
  %v32 = vld [vmem:[%s1 + $0x30] sm:$0xf]
  %v33 = vld [vmem:[%s1 + $0x34] sm:$0xf]
  %v34 = vld [vmem:[%s1 + $0x38] sm:$0xf]
  %v35 = vld [vmem:[%s1 + $0x3c] sm:$0xf]
  %v36 = vld [vmem:[%s2] sm:$0x1]
  %v38 = vlaneseq
  %v39 = vshrl.u32 %v38, 7
  %v40 = vsub.s32 0, %v39
  %v41 = vrot.slane %v36, %v40
  %v45 = vunpack.c.l.b16 %v18
  %v46 = vunpack.c.l.b16 %v19
  %v47 = vpack.c.b16 %v46, %v45
  %v65 = vunpack.c.l.b16 %v20
  %v66 = vunpack.c.l.b16 %v21
  %v67 = vunpack.c.l.b16 %v22
  %v68 = vunpack.c.l.b16 %v23
  %v69 = vunpack.c.l.b16 %v24
  %v70 = vunpack.c.l.b16 %v25
  %v71 = vunpack.c.l.b16 %v26
  %v72 = vunpack.c.l.b16 %v27
  %v73 = vunpack.c.l.b16 %v28
  %v74 = vunpack.c.l.b16 %v29
  %v75 = vunpack.c.l.b16 %v30
  %v76 = vunpack.c.l.b16 %v31
  %v77 = vunpack.c.l.b16 %v32
  %v78 = vunpack.c.l.b16 %v33
  %v79 = vunpack.c.l.b16 %v34
  %v80 = vunpack.c.l.b16 %v35
  %v81 = vpack.c.b16 %v66, %v65
  %v82 = vpack.c.b16 %v68, %v67
  %v83 = vpack.c.b16 %v70, %v69
  %v84 = vpack.c.b16 %v72, %v71
  %v85 = vpack.c.b16 %v74, %v73
  %v86 = vpack.c.b16 %v76, %v75
  %v87 = vpack.c.b16 %v78, %v77
  %v88 = vpack.c.b16 %v80, %v79
  %97 = vmatprep.subr.bf16.mxu0 0
  %98 = vmatpush1.bf16.msra.mxu0 %v81
  %99 = vmatprep.subr.bf16.mxu0 0
  %100 = vmatpush1.bf16.msra.mxu0 %v82
  %101 = vmatprep.subr.bf16.mxu0 0
  %102 = vmatpush1.bf16.msra.mxu0 %v83
  %103 = vmatprep.subr.bf16.mxu0 0
  %104 = vmatpush1.bf16.msra.mxu0 %v84
  %105 = vmatprep.subr.bf16.mxu0 0
  %106 = vmatpush1.bf16.msra.mxu0 %v85
  %107 = vmatprep.subr.bf16.mxu0 0
  %108 = vmatpush1.bf16.msra.mxu0 %v86
  %109 = vmatprep.subr.bf16.mxu0 0
  %110 = vmatpush1.bf16.msra.mxu0 %v87
  %111 = vmatprep.subr.bf16.mxu0 0
  %112 = vmatpush1.bf16.msra.mxu0 %v88
  %113 = vmatprep.subr.bf16.mxu0 0
  %114 = vmatpush1.bf16.msra.mxu0 0
  %115 = vmatprep.subr.bf16.mxu0 0
  %116 = vmatpush1.bf16.msra.mxu0 0
  %117 = vmatprep.subr.bf16.mxu0 0
  %118 = vmatpush1.bf16.msra.mxu0 0
  %119 = vmatprep.subr.bf16.mxu0 0
  %120 = vmatpush1.bf16.msra.mxu0 0
  %121 = vmatprep.subr.bf16.mxu0 0
  %122 = vmatpush1.bf16.msra.mxu0 0
  %123 = vmatprep.subr.bf16.mxu0 0
  %124 = vmatpush1.bf16.msra.mxu0 0
  %125 = vmatprep.subr.bf16.mxu0 0
  %126 = vmatpush1.bf16.msra.mxu0 0
  %127 = vmatprep.subr.bf16.mxu0 0
  %128 = vmatpush1.bf16.msra.mxu0 0
  %129 = vmatprep.mubr.bf16.mxu0 0
  %130 = vmatmul.mubr.bf16.gmra.mrb[0].mxu0 %v47
  %v131 = vpop.f32.mrb[0].mxu0
  %v132 = vadd.f32 %v41, %v131
  %v133 = vpop.f32.mrb[0].mxu0
  %v134 = vpop.f32.mrb[0].mxu0
  %v135 = vadd.f32 %v41, %v134
  %v136 = vpop.f32.mrb[0].mxu0
  %137 = vdwg.mxu0
  %v138 = vld [vmem:[%s3] sm:$0xff]
  %v139 = vld [vmem:[%s3 + $0x8] sm:$0xff]
  %v140 = vadd.f32 %v132, %v138
  %v141 = vadd.f32 %v135, %v139
  %vm142 = vcmask 261120
  %143 = vst.msk [vmem:[%s4] sm:$0xff] %vm142, %v140
  %144 = vst.msk [vmem:[%s4 + $0x8] sm:$0xff] %vm142, %v141
  // Predicated region
  $region18: #{gpt2_forward.15} parent=0 // pred_check
    _
  $region19: #{gpt2_forward.15} parent=0 // pred_check_branch
    %146 = sbr.rel (0) target = $region21
  $region20: #{gpt2_forward.15} parent=0 // pred_region
    _
  $region21: #{gpt2_forward.15} parent=0 // pred_fallthru
    _
  // Predicated region
  $region22: #{gpt2_forward.15} parent=0 // pred_check
    _
  $region23: #{gpt2_forward.15} parent=0 // pred_check_branch
    %148 = sbr.rel (0) target = $region25
  $region24: #{gpt2_forward.15} parent=0 // pred_region
    _
  $region25: #{gpt2_forward.15} parent=0 // pred_fallthru
    _

// kernel: gpt2_forward.21
$region0: #{gpt2_forward.21}
  #allocation0 [shape = 'u32[]', space=smem, size = 0x4, offset = 0x4, fixed_abs, tag = 'smem constant byte address 0x4 - core index']
  #allocation1 [shape = 'u32[144,128]{1,0:T(1,128)}', space=vmem, size = 0x12000, scoped, tag = 'internal scratch']
  %s0 = inlined_call_operand.vmem [shape: f32[16,32], index: 0, kind: input, shape index: {}]
  %s1 = inlined_call_operand.vmem [shape: f32[1,32], index: 1, kind: input, shape index: {}]
  %s2 = inlined_call_operand.vmem [shape: f32[1,32], index: 2, kind: input, shape index: {}]
  %s3 = inlined_call_operand.vmem [shape: bf16[32,64], index: 3, kind: input, shape index: {}]
  %s4 = inlined_call_operand.hbm [shape: f32[16,64], index: 4, kind: output, shape index: {}]
  %s5 = sld [smem:[#allocation0]]
  $region26: #{gpt2_forward.21} parent=0
    _
  %s7 = ssub.s32 1, %s5
  %s8 = scalar_select 0, %s7, %s5
  $region1: #{gpt2_forward.21} parent=0
    #allocation2 [shape = 'u8[8192]{0}', space=vmem, size = 0x2000, scoped, tag = 'output window, operand 0, single buffered']
    #allocation3 [shape = 's32[1]{0}', space=sflag, size = 0x4, scoped, tag = 'scoped memory for gpt2_forward.21']
    %9 = vsyncpa [#allocation3], 0
    // Predicated region
    $region2: #{gpt2_forward.21} parent=1 // pred_check
      _
    $region3: #{gpt2_forward.21} parent=1 // pred_check_branch
      %11 = sbr.rel (0) target = $region5
    $region4: #{gpt2_forward.21} parent=1 // pred_region
      _
    $region5: #{gpt2_forward.21} parent=1 // pred_fallthru
      _
    // Predicated region
    $region6: #{gpt2_forward.21} parent=1 // pred_check
      _
    $region7: #{gpt2_forward.21} parent=1 // pred_check_branch
      %13 = sbr.rel (0) target = $region9
    $region8: #{gpt2_forward.21} parent=1 // pred_region
      _
    $region9: #{gpt2_forward.21} parent=1 // pred_fallthru
      _
    // Predicated region
    $region10: #{gpt2_forward.21} parent=1 // pred_check
      _
    $region11: #{gpt2_forward.21} parent=1 // pred_check_branch
      %15 = sbr.rel (0) target = $region13
    $region12: #{gpt2_forward.21} parent=1 // pred_region
      _
    $region13: #{gpt2_forward.21} parent=1 // pred_fallthru
      _
    // Predicated region
    $region14: #{gpt2_forward.21} parent=1 // pred_check
      _
    $region15: #{gpt2_forward.21} parent=1 // pred_check_branch
      %17 = sbr.rel (0) target = $region17
    $region16: #{gpt2_forward.21} parent=1 // pred_region
      _
    $region17: #{gpt2_forward.21} parent=1 // pred_fallthru
      _
    %v19 = vld [vmem:[%s0] sm:$0xff]
    %v20 = vld [vmem:[%s0 + $0x8] sm:$0xff]
    %v21 = vld [vmem:[%s1] sm:$0x1]
    %v22 = vld [vmem:[%s2] sm:$0x1]
    %vm23 = vcmask 261120
    %v24 = vsel %vm23, %v19, 0.0
    %25 = vadd.xlane.f32.xlu0 %v24
    %v26 = vpop.xlane.xlu0 %25
    %v27 = vsel %vm23, %v20, 0.0
    %28 = vadd.xlane.f32.xlu0 %v27
    %v29 = vpop.xlane.xlu0 %28
    %v30 = vrcp.pop 32.0
    %v31 = vmul.f32 %v26, %v30
    %v32 = vmul.f32 %v29, %v30
    %v33 = vsub.f32 %v19, %v31
    %v34 = vsub.f32 %v20, %v32
    %v35 = vmul.f32 %v33, %v33
    %v36 = vmul.f32 %v34, %v34
    %v37 = vsel %vm23, %v35, 0.0
    %38 = vadd.xlane.f32.xlu0 %v37
    %v39 = vpop.xlane.xlu0 %38
    %v40 = vsel %vm23, %v36, 0.0
    %41 = vadd.xlane.f32.xlu0 %v40
    %v42 = vpop.xlane.xlu0 %41
    %v43 = vmul.f32 %v39, %v30
    %v44 = vmul.f32 %v42, %v30
    %v45 = vadd.f32 %v43, 1e-05
    %v46 = vadd.f32 %v44, 1e-05
    %v47 = vrsqrt.pop %v45
    %v48 = vrsqrt.pop %v46
    %v49 = vmul.f32 %v33, %v47
    %v50 = vmul.f32 %v34, %v48
    %v52 = vlaneseq
    %v53 = vshrl.u32 %v52, 7
    %v54 = vsub.s32 0, %v53
    %v55 = vrot.slane %v21, %v54
    %v57 = vmul.f32 %v49, %v55
    %v58 = vmul.f32 %v50, %v55
    %v60 = vlaneseq
    %v61 = vshrl.u32 %v60, 7
    %v62 = vsub.s32 0, %v61
    %v63 = vrot.slane %v22, %v62
    %v65 = vadd.f32 %v57, %v63
    %v66 = vadd.f32 %v58, %v63
    %v67 = vpack.c.bf16 %v66, %v65
    %v68 = vld [vmem:[%s3] sm:$0xf]
    %v69 = vld [vmem:[%s3 + $0x4] sm:$0xf]
    %v70 = vld [vmem:[%s3 + $0x8] sm:$0xf]
    %v71 = vld [vmem:[%s3 + $0xc] sm:$0xf]
    %v76 = vunpack.c.l.b16 %v68
    %v77 = vunpack.c.l.b16 %v69
    %v78 = vunpack.c.l.b16 %v70
    %v79 = vunpack.c.l.b16 %v71
    %v80 = vpack.c.b16 %v77, %v76
    %v81 = vpack.c.b16 %v79, %v78
    %v85 = vsel %vm23, %v67, 0
    %87 = vmatprep.subr.bf16.mxu0 0
    %88 = vmatpush1.bf16.msra.mxu0 %v80
    %89 = vmatprep.subr.bf16.mxu0 0
    %90 = vmatpush1.bf16.msra.mxu0 %v81
    %91 = vmatprep.subr.bf16.mxu0 0
    %92 = vmatpush1.bf16.msra.mxu0 0
    %93 = vmatprep.subr.bf16.mxu0 0
    %94 = vmatpush1.bf16.msra.mxu0 0
    %95 = vmatprep.subr.bf16.mxu0 0
    %96 = vmatpush1.bf16.msra.mxu0 0
    %97 = vmatprep.subr.bf16.mxu0 0
    %98 = vmatpush1.bf16.msra.mxu0 0
    %99 = vmatprep.subr.bf16.mxu0 0
    %100 = vmatpush1.bf16.msra.mxu0 0
    %101 = vmatprep.subr.bf16.mxu0 0
    %102 = vmatpush1.bf16.msra.mxu0 0
    %103 = vmatprep.subr.bf16.mxu0 0
    %104 = vmatpush1.bf16.msra.mxu0 0
    %105 = vmatprep.subr.bf16.mxu0 0
    %106 = vmatpush1.bf16.msra.mxu0 0
    %107 = vmatprep.subr.bf16.mxu0 0
    %108 = vmatpush1.bf16.msra.mxu0 0
    %109 = vmatprep.subr.bf16.mxu0 0
    %110 = vmatpush1.bf16.msra.mxu0 0
    %111 = vmatprep.subr.bf16.mxu0 0
    %112 = vmatpush1.bf16.msra.mxu0 0
    %113 = vmatprep.subr.bf16.mxu0 0
    %114 = vmatpush1.bf16.msra.mxu0 0
    %115 = vmatprep.subr.bf16.mxu0 0
    %116 = vmatpush1.bf16.msra.mxu0 0
    %117 = vmatprep.subr.bf16.mxu0 0
    %118 = vmatpush1.bf16.msra.mxu0 0
    %119 = vmatprep.mubr.bf16.mxu0 0
    %120 = vmatmul.mubr.bf16.gmra.mrb[0].mxu0 %v85
    %v121 = vpop.f32.mrb[0].mxu0
    %v122 = vadd.f32 0.0, %v121
    %v123 = vpop.f32.mrb[0].mxu0
    %v124 = vpop.f32.mrb[0].mxu0
    %v125 = vadd.f32 0.0, %v124
    %v126 = vpop.f32.mrb[0].mxu0
    %127 = vdwg.mxu0
    %vm128 = vcmask 523264
    %129 = vst.msk [vmem:[#allocation2] sm:$0xff] %vm128, %v122
    %130 = vst.msk [vmem:[#allocation2 + $0x8] sm:$0xff] %vm128, %v125
    // Predicated region
    $region18: #{gpt2_forward.21} parent=1 // pred_check
      _
    $region19: #{gpt2_forward.21} parent=1 // pred_check_branch
      %132 = sbr.rel (0) target = $region21
    $region20: #{gpt2_forward.21} parent=1 // pred_region
      %s134 = ssub.s32 256, 256
      %135 = vsyncadd [#allocation3], %s134
      %s136 = sshll.u32 [#allocation2], 4
      %s137 = int_to_ptr.vmem [resolvable:$true] %s136
      %142 = dma.vmem_to_hbm [thread:$0]  %s137, 256, %s4, [#allocation3], 128, 128, 8
    $region21: #{gpt2_forward.21} parent=1 // pred_fallthru
      _
    // Predicated region
    $region22: #{gpt2_forward.21} parent=1 // pred_check
      _
    $region23: #{gpt2_forward.21} parent=1 // pred_check_branch
      %144 = sbr.rel (0) target = $region25
    $region24: #{gpt2_forward.21} parent=1 // pred_region
      %145 = dma.done [#allocation3], 256
    $region25: #{gpt2_forward.21} parent=1 // pred_fallthru
      _
    %146 = vsyncpa [#allocation3], 1

</llo_original>
